<compile_context>
chip_gen: v7x
topology: tpu7x:2x2x1
jax: 0.10.0
libtpu: 0.0.40
codegen_flags: <defaults>
</compile_context>

<pallas_src>
import functools

import jax
import jax.numpy as jnp
from jax.experimental import pallas as pl
from jax.experimental.pallas import tpu as pltpu

BN_EPS = 1e-5
# Operand dtype for the conv GEMMs.  Kept f32 to match torch float32 numerics;
# flip to jnp.bfloat16 on v6e/v7x for 2x MXU rate (accumulation stays f32 via
# preferred_element_type) — at these shapes the MXU is nowhere near binding.
MXU_DTYPE = jnp.float32


# ----------------------------------------------------------------------------
# Fused kernel
# ----------------------------------------------------------------------------
def _block_kernel(H, W,
                  x_ref, tT_ref, bsel_ref, ii_ref, jj_ref,
                  wt_ref, bt_ref,
                  w1_ref, b1_ref, g1_ref, beta1_ref,
                  w2_ref, b2_ref, g2_ref, beta2_ref,
                  wd_ref, bd_ref,
                  out_ref):
    """Whole Block forward in one kernel.

    Activation layout: (C, N) with N = B*H*W on lanes; column n encodes
    (b, i, j) = (n // (H*W), (n // W) % H, n % W).  Each conv = one im2col
    GEMM; the im2col matrix is built with lane-rolls + border masks.
    """
    f32 = jnp.float32
    N = x_ref.shape[1]
    ii = ii_ref[...]          # (1, N) int32: spatial row index of column n
    jj = jj_ref[...]          # (1, N) int32: spatial col index of column n

    # Tap sets: 3x3 (both convs) and 4x4 stride-2 transform (window start -1).
    offs3 = [(oy, ox) for oy in (-1, 0, 1) for ox in (-1, 0, 1)]
    offs4 = [(ky - 1, kx - 1) for ky in range(4) for kx in range(4)]

    # Hoisted per-tap validity masks, computed ONCE over the union of tap sets
    # ({-1,0,1,2}^2 superset of {-1,0,1}^2) and reused by every im2col below.
    masks = {}
    for oy, ox in offs4:
        if (oy, ox) == (0, 0):
            masks[(oy, ox)] = None                       # always in-bounds
        else:
            masks[(oy, ox)] = ((ii + oy >= 0) & (ii + oy < H) &
                               (jj + ox >= 0) & (jj + ox < W))

    def im2col(a, offsets):
        # a: (C, N).  Returns (len(offsets)*C, N) where rows [tap*C + c] hold
        # a[c] shifted by (oy, ox), zero where the tap leaves the image
        # (i.e. exactly the zero-padded conv input).
        pieces = []
        for oy, ox in offsets:
            shift = (-(oy * W + ox)) % N
            rolled = a if shift == 0 else pltpu.roll(a, shift, axis=1)
            m = masks[(oy, ox)]
            pieces.append(rolled if m is None else jnp.where(m, rolled, 0.0))
        return jnp.concatenate(pieces, axis=0)

    def conv_gemm(w_r, patches, b_r):
        return (jnp.dot(w_r[...].astype(MXU_DTYPE), patches.astype(MXU_DTYPE),
                        preferred_element_type=f32) + b_r[...])

    def bn_train(a, gamma, beta):
        mean = jnp.mean(a, axis=1, keepdims=True)
        var = jnp.mean((a - mean) * (a - mean), axis=1, keepdims=True)
        return (a - mean) * jax.lax.rsqrt(var + BN_EPS) * gamma + beta

    # time_emb = relu(Linear(t)) -> (Cout, B); broadcast over spatial with a
    # K=B one-hot GEMM (stays lane-dense, no reshapes).
    temb = jnp.maximum(
        jnp.dot(wt_ref[...], tT_ref[...], preferred_element_type=f32) + bt_ref[...],
        0.0)
    temb_full = jnp.dot(temb, bsel_ref[...], preferred_element_type=f32)   # (Cout, N)

    # h1 = BN1(relu(conv1(x))) + time_emb
    a1 = conv_gemm(w1_ref, im2col(x_ref[...], offs3), b1_ref)              # (Cout, N)
    h1 = bn_train(jnp.maximum(a1, 0.0), g1_ref[...], beta1_ref[...]) + temb_full

    # h2 = BN2(relu(conv2(h1)))
    a2 = conv_gemm(w2_ref, im2col(h1, offs3), b2_ref)                      # (Cout, N)
    h2 = bn_train(jnp.maximum(a2, 0.0), g2_ref[...], beta2_ref[...])

    # transform: Conv2d(C, C, 4, stride=2, pad=1), evaluated at every (i, j);
    # odd-(i, j) columns are discarded by the wrapper's strided subsample.
    full = conv_gemm(wd_ref, im2col(h2, offs4), bd_ref)                    # (Cout, N)
    out_ref[...] = full.astype(out_ref.dtype)


# ----------------------------------------------------------------------------
# Parameters (torch-style layouts) and wrapper
# ----------------------------------------------------------------------------
def init_block_params(key, in_ch, out_ch, time_emb_dim):
    ks = jax.random.split(key, 6)
    f32 = jnp.float32
    return {
        # torch layouts: Conv2d (Cout, Cin, kh, kw), Linear (Cout, E)
        "conv1_w": 0.1 * jax.random.normal(ks[0], (out_ch, in_ch, 3, 3), f32),
        "conv1_b": 0.1 * jax.random.normal(ks[1], (out_ch,), f32),
        "conv2_w": 0.1 * jax.random.normal(ks[2], (out_ch, out_ch, 3, 3), f32),
        "conv2_b": 0.1 * jax.random.normal(ks[3], (out_ch,), f32),
        "time_w": 0.1 * jax.random.normal(ks[4], (out_ch, time_emb_dim), f32),
        "time_b": 0.05 * jnp.ones((out_ch,), f32),
        "trans_w": 0.1 * jax.random.normal(ks[5], (out_ch, out_ch, 4, 4), f32),
        "trans_b": jnp.zeros((out_ch,), f32),
        # BatchNorm affine params: torch default init (weight=1, bias=0)
        "bn1_g": jnp.ones((out_ch,), f32),
        "bn1_b": jnp.zeros((out_ch,), f32),
        "bn2_g": jnp.ones((out_ch,), f32),
        "bn2_b": jnp.zeros((out_ch,), f32),
    }


@jax.jit
def block_forward(x_nchw, t, params):
    """Block.forward (up=False).  x:(B,Cin,H,W) NCHW, t:(B,E) -> (B,Cout,H/2,W/2)."""
    f32 = jnp.float32
    B, Cin, H, W = x_nchw.shape
    Cout = params["conv1_w"].shape[0]
    N = B * H * W

    # ---- tiny layout prep (all < 20 KB; activations stay flat in the kernel) --
    # Pad Cin up to a sublane multiple (8) so every im2col piece of conv1 is
    # sublane-aligned inside the kernel (zero channels contribute nothing).
    Cin_p = ((Cin + 7) // 8) * 8
    x2 = jnp.transpose(x_nchw, (1, 0, 2, 3)).reshape(Cin, N).astype(f32)   # (Cin, N)
    if Cin_p != Cin:
        x2 = jnp.concatenate([x2, jnp.zeros((Cin_p - Cin, N), f32)], axis=0)
    tT = jnp.transpose(t.astype(f32))                                      # (E, B)

    n = jnp.arange(N, dtype=jnp.int32)
    ii = ((n // W) % H)[None, :]                                           # (1, N)
    jj = (n % W)[None, :]                                                  # (1, N)
    bsel = (jnp.arange(B, dtype=jnp.int32)[:, None] ==
            (n // (H * W))[None, :]).astype(f32)                           # (B, N)

    def conv_w_mat(w, ci_pad=None):
        # (Cout, Cin, kh, kw) -> (Cout, kh*kw*Cin_p), k = tap*Cin_p + ci.
        co, ci, kh, kw = w.shape
        if ci_pad is not None and ci_pad != ci:
            w = jnp.concatenate(
                [w, jnp.zeros((co, ci_pad - ci, kh, kw), w.dtype)], axis=1)
            ci = ci_pad
        return jnp.transpose(w, (0, 2, 3, 1)).reshape(co, kh * kw * ci)

    col = lambda v: v.reshape(-1, 1).astype(f32)                           # (Cout, 1)

    args = (
        x2, tT, bsel, ii, jj,
        params["time_w"].astype(f32), col(params["time_b"]),
        conv_w_mat(params["conv1_w"], Cin_p), col(params["conv1_b"]),
        col(params["bn1_g"]), col(params["bn1_b"]),
        conv_w_mat(params["conv2_w"]), col(params["conv2_b"]),
        col(params["bn2_g"]), col(params["bn2_b"]),
        conv_w_mat(params["trans_w"]), col(params["trans_b"]),
    )

    full = pl.pallas_call(
        functools.partial(_block_kernel, H, W),
        out_shape=jax.ShapeDtypeStruct((Cout, N), f32),
        in_specs=[pl.BlockSpec(memory_space=pltpu.MemorySpace.VMEM)] * len(args),
        out_specs=pl.BlockSpec(memory_space=pltpu.MemorySpace.VMEM),
        compiler_params=pltpu.CompilerParams(vmem_limit_bytes=32 * 1024 * 1024),
    )(*args)

    # factor-4 spatial subsample of the stride-2 conv (tiny strided slice on a
    # 16 KB tensor) and back to torch NCHW.
    out = full.reshape(Cout, B, H, W)[:, :, ::2, ::2]
    return jnp.transpose(out, (1, 0, 2, 3))


# ----------------------------------------------------------------------------
# Pure-JAX reference (torch semantics, training-mode BN) for validation
# ----------------------------------------------------------------------------
def _reference_forward(x_nchw, t, params):
    f32 = jnp.float32
    hi = jax.lax.Precision.HIGHEST

    def conv(h, w, b, stride):
        out = jax.lax.conv_general_dilated(
            h.astype(f32), w.astype(f32), window_strides=(stride, stride),
            padding=((1, 1), (1, 1)),
            dimension_numbers=("NCHW", "OIHW", "NCHW"), precision=hi)
        return out + b.reshape(1, -1, 1, 1)

    def bn(h, g, b):
        mean = h.mean(axis=(0, 2, 3), keepdims=True)
        var = ((h - mean) ** 2).mean(axis=(0, 2, 3), keepdims=True)
        return ((h - mean) / jnp.sqrt(var + BN_EPS)) * g.reshape(1, -1, 1, 1) \
               + b.reshape(1, -1, 1, 1)

    relu = lambda v: jnp.maximum(v, 0.0)
    h = bn(relu(conv(x_nchw, params["conv1_w"], params["conv1_b"], 1)),
           params["bn1_g"], params["bn1_b"])
    temb = relu(jnp.dot(t.astype(f32), params["time_w"].T, precision=hi)
                + params["time_b"])
    h = h + temb[:, :, None, None]
    h = bn(relu(conv(h, params["conv2_w"], params["conv2_b"], 1)),
           params["bn2_g"], params["bn2_b"])
    return conv(h, params["trans_w"], params["trans_b"], 2)


# ----------------------------------------------------------------------------
if __name__ == "__main__":
    B, in_ch, out_ch, H, W, time_emb_dim = 2, 4, 8, 16, 16, 32

    key = jax.random.PRNGKey(0)
    kx, kt, kp = jax.random.split(key, 3)
    x = jax.random.normal(kx, (B, in_ch, H, W), jnp.float32)   # NCHW, like torch
    t = jax.random.normal(kt, (B, time_emb_dim), jnp.float32)
    params = init_block_params(kp, in_ch, out_ch, time_emb_dim)

    out = jax.block_until_ready(block_forward(x, t, params))

    assert out.shape == (B, out_ch, H // 2, W // 2), out.shape
    assert bool(jnp.all(jnp.isfinite(out)))

    ref = _reference_forward(x, t, params)
    max_err = float(jnp.max(jnp.abs(out - ref)))
    assert max_err < 2e-2, f"mismatch vs pure-JAX reference: max|diff|={max_err}"

    print("KERNEL_OK")
</pallas_src>

<mosaic_0001>
module attributes {stable_mosaic.version = 11 : i64} {
  func.func @_block_kernel(%arg0: memref<8x512xf32, #tpu.memory_space<vmem>>, %arg1: memref<32x2xf32, #tpu.memory_space<vmem>>, %arg2: memref<2x512xf32, #tpu.memory_space<vmem>>, %arg3: memref<1x512xi32, #tpu.memory_space<vmem>>, %arg4: memref<1x512xi32, #tpu.memory_space<vmem>>, %arg5: memref<8x32xf32, #tpu.memory_space<vmem>>, %arg6: memref<8x1xf32, #tpu.memory_space<vmem>>, %arg7: memref<8x72xf32, #tpu.memory_space<vmem>>, %arg8: memref<8x1xf32, #tpu.memory_space<vmem>>, %arg9: memref<8x1xf32, #tpu.memory_space<vmem>>, %arg10: memref<8x1xf32, #tpu.memory_space<vmem>>, %arg11: memref<8x72xf32, #tpu.memory_space<vmem>>, %arg12: memref<8x1xf32, #tpu.memory_space<vmem>>, %arg13: memref<8x1xf32, #tpu.memory_space<vmem>>, %arg14: memref<8x1xf32, #tpu.memory_space<vmem>>, %arg15: memref<8x128xf32, #tpu.memory_space<vmem>>, %arg16: memref<8x1xf32, #tpu.memory_space<vmem>>, %arg17: memref<8x512xf32, #tpu.memory_space<vmem>>) attributes {dimension_semantics = [], scalar_prefetch = 0 : i64, scratch_operands = 0 : i64, tpu.core_type = #tpu.core_type<tc>} {
    %c0 = arith.constant 0 : index
    %c0_0 = arith.constant 0 : index
    %0 = vector.load %arg3[%c0, %c0_0] : memref<1x512xi32, #tpu.memory_space<vmem>>, vector<1x512xi32>
    %c0_1 = arith.constant 0 : index
    %c0_2 = arith.constant 0 : index
    %1 = vector.load %arg4[%c0_1, %c0_2] : memref<1x512xi32, #tpu.memory_space<vmem>>, vector<1x512xi32>
    %c-1_i32 = arith.constant -1 : i32
    %2 = vector.broadcast %c-1_i32 : i32 to vector<1x512xi32>
    %3 = arith.addi %0, %2 : vector<1x512xi32>
    %c0_i32 = arith.constant 0 : i32
    %4 = vector.broadcast %c0_i32 : i32 to vector<1x512xi32>
    %5 = arith.cmpi sge, %3, %4 : vector<1x512xi32>
    %c-1_i32_3 = arith.constant -1 : i32
    %6 = vector.broadcast %c-1_i32_3 : i32 to vector<1x512xi32>
    %7 = arith.addi %0, %6 : vector<1x512xi32>
    %c16_i32 = arith.constant 16 : i32
    %8 = vector.broadcast %c16_i32 : i32 to vector<1x512xi32>
    %9 = arith.cmpi slt, %7, %8 : vector<1x512xi32>
    %10 = arith.andi %5, %9 : vector<1x512xi1>
    %c-1_i32_4 = arith.constant -1 : i32
    %11 = vector.broadcast %c-1_i32_4 : i32 to vector<1x512xi32>
    %12 = arith.addi %1, %11 : vector<1x512xi32>
    %c0_i32_5 = arith.constant 0 : i32
    %13 = vector.broadcast %c0_i32_5 : i32 to vector<1x512xi32>
    %14 = arith.cmpi sge, %12, %13 : vector<1x512xi32>
    %15 = arith.andi %10, %14 : vector<1x512xi1>
    %c-1_i32_6 = arith.constant -1 : i32
    %16 = vector.broadcast %c-1_i32_6 : i32 to vector<1x512xi32>
    %17 = arith.addi %1, %16 : vector<1x512xi32>
    %c16_i32_7 = arith.constant 16 : i32
    %18 = vector.broadcast %c16_i32_7 : i32 to vector<1x512xi32>
    %19 = arith.cmpi slt, %17, %18 : vector<1x512xi32>
    %20 = arith.andi %15, %19 : vector<1x512xi1>
    %c-1_i32_8 = arith.constant -1 : i32
    %21 = vector.broadcast %c-1_i32_8 : i32 to vector<1x512xi32>
    %22 = arith.addi %0, %21 : vector<1x512xi32>
    %c0_i32_9 = arith.constant 0 : i32
    %23 = vector.broadcast %c0_i32_9 : i32 to vector<1x512xi32>
    %24 = arith.cmpi sge, %22, %23 : vector<1x512xi32>
    %c-1_i32_10 = arith.constant -1 : i32
    %25 = vector.broadcast %c-1_i32_10 : i32 to vector<1x512xi32>
    %26 = arith.addi %0, %25 : vector<1x512xi32>
    %c16_i32_11 = arith.constant 16 : i32
    %27 = vector.broadcast %c16_i32_11 : i32 to vector<1x512xi32>
    %28 = arith.cmpi slt, %26, %27 : vector<1x512xi32>
    %29 = arith.andi %24, %28 : vector<1x512xi1>
    %c0_i32_12 = arith.constant 0 : i32
    %30 = vector.broadcast %c0_i32_12 : i32 to vector<1x512xi32>
    %31 = arith.addi %1, %30 : vector<1x512xi32>
    %c0_i32_13 = arith.constant 0 : i32
    %32 = vector.broadcast %c0_i32_13 : i32 to vector<1x512xi32>
    %33 = arith.cmpi sge, %31, %32 : vector<1x512xi32>
    %34 = arith.andi %29, %33 : vector<1x512xi1>
    %c0_i32_14 = arith.constant 0 : i32
    %35 = vector.broadcast %c0_i32_14 : i32 to vector<1x512xi32>
    %36 = arith.addi %1, %35 : vector<1x512xi32>
    %c16_i32_15 = arith.constant 16 : i32
    %37 = vector.broadcast %c16_i32_15 : i32 to vector<1x512xi32>
    %38 = arith.cmpi slt, %36, %37 : vector<1x512xi32>
    %39 = arith.andi %34, %38 : vector<1x512xi1>
    %c-1_i32_16 = arith.constant -1 : i32
    %40 = vector.broadcast %c-1_i32_16 : i32 to vector<1x512xi32>
    %41 = arith.addi %0, %40 : vector<1x512xi32>
    %c0_i32_17 = arith.constant 0 : i32
    %42 = vector.broadcast %c0_i32_17 : i32 to vector<1x512xi32>
    %43 = arith.cmpi sge, %41, %42 : vector<1x512xi32>
    %c-1_i32_18 = arith.constant -1 : i32
    %44 = vector.broadcast %c-1_i32_18 : i32 to vector<1x512xi32>
    %45 = arith.addi %0, %44 : vector<1x512xi32>
    %c16_i32_19 = arith.constant 16 : i32
    %46 = vector.broadcast %c16_i32_19 : i32 to vector<1x512xi32>
    %47 = arith.cmpi slt, %45, %46 : vector<1x512xi32>
    %48 = arith.andi %43, %47 : vector<1x512xi1>
    %c1_i32 = arith.constant 1 : i32
    %49 = vector.broadcast %c1_i32 : i32 to vector<1x512xi32>
    %50 = arith.addi %1, %49 : vector<1x512xi32>
    %c0_i32_20 = arith.constant 0 : i32
    %51 = vector.broadcast %c0_i32_20 : i32 to vector<1x512xi32>
    %52 = arith.cmpi sge, %50, %51 : vector<1x512xi32>
    %53 = arith.andi %48, %52 : vector<1x512xi1>
    %c1_i32_21 = arith.constant 1 : i32
    %54 = vector.broadcast %c1_i32_21 : i32 to vector<1x512xi32>
    %55 = arith.addi %1, %54 : vector<1x512xi32>
    %c16_i32_22 = arith.constant 16 : i32
    %56 = vector.broadcast %c16_i32_22 : i32 to vector<1x512xi32>
    %57 = arith.cmpi slt, %55, %56 : vector<1x512xi32>
    %58 = arith.andi %53, %57 : vector<1x512xi1>
    %c-1_i32_23 = arith.constant -1 : i32
    %59 = vector.broadcast %c-1_i32_23 : i32 to vector<1x512xi32>
    %60 = arith.addi %0, %59 : vector<1x512xi32>
    %c0_i32_24 = arith.constant 0 : i32
    %61 = vector.broadcast %c0_i32_24 : i32 to vector<1x512xi32>
    %62 = arith.cmpi sge, %60, %61 : vector<1x512xi32>
    %c-1_i32_25 = arith.constant -1 : i32
    %63 = vector.broadcast %c-1_i32_25 : i32 to vector<1x512xi32>
    %64 = arith.addi %0, %63 : vector<1x512xi32>
    %c16_i32_26 = arith.constant 16 : i32
    %65 = vector.broadcast %c16_i32_26 : i32 to vector<1x512xi32>
    %66 = arith.cmpi slt, %64, %65 : vector<1x512xi32>
    %67 = arith.andi %62, %66 : vector<1x512xi1>
    %c2_i32 = arith.constant 2 : i32
    %68 = vector.broadcast %c2_i32 : i32 to vector<1x512xi32>
    %69 = arith.addi %1, %68 : vector<1x512xi32>
    %c0_i32_27 = arith.constant 0 : i32
    %70 = vector.broadcast %c0_i32_27 : i32 to vector<1x512xi32>
    %71 = arith.cmpi sge, %69, %70 : vector<1x512xi32>
    %72 = arith.andi %67, %71 : vector<1x512xi1>
    %c2_i32_28 = arith.constant 2 : i32
    %73 = vector.broadcast %c2_i32_28 : i32 to vector<1x512xi32>
    %74 = arith.addi %1, %73 : vector<1x512xi32>
    %c16_i32_29 = arith.constant 16 : i32
    %75 = vector.broadcast %c16_i32_29 : i32 to vector<1x512xi32>
    %76 = arith.cmpi slt, %74, %75 : vector<1x512xi32>
    %77 = arith.andi %72, %76 : vector<1x512xi1>
    %c0_i32_30 = arith.constant 0 : i32
    %78 = vector.broadcast %c0_i32_30 : i32 to vector<1x512xi32>
    %79 = arith.addi %0, %78 : vector<1x512xi32>
    %c0_i32_31 = arith.constant 0 : i32
    %80 = vector.broadcast %c0_i32_31 : i32 to vector<1x512xi32>
    %81 = arith.cmpi sge, %79, %80 : vector<1x512xi32>
    %c0_i32_32 = arith.constant 0 : i32
    %82 = vector.broadcast %c0_i32_32 : i32 to vector<1x512xi32>
    %83 = arith.addi %0, %82 : vector<1x512xi32>
    %c16_i32_33 = arith.constant 16 : i32
    %84 = vector.broadcast %c16_i32_33 : i32 to vector<1x512xi32>
    %85 = arith.cmpi slt, %83, %84 : vector<1x512xi32>
    %86 = arith.andi %81, %85 : vector<1x512xi1>
    %c-1_i32_34 = arith.constant -1 : i32
    %87 = vector.broadcast %c-1_i32_34 : i32 to vector<1x512xi32>
    %88 = arith.addi %1, %87 : vector<1x512xi32>
    %c0_i32_35 = arith.constant 0 : i32
    %89 = vector.broadcast %c0_i32_35 : i32 to vector<1x512xi32>
    %90 = arith.cmpi sge, %88, %89 : vector<1x512xi32>
    %91 = arith.andi %86, %90 : vector<1x512xi1>
    %c-1_i32_36 = arith.constant -1 : i32
    %92 = vector.broadcast %c-1_i32_36 : i32 to vector<1x512xi32>
    %93 = arith.addi %1, %92 : vector<1x512xi32>
    %c16_i32_37 = arith.constant 16 : i32
    %94 = vector.broadcast %c16_i32_37 : i32 to vector<1x512xi32>
    %95 = arith.cmpi slt, %93, %94 : vector<1x512xi32>
    %96 = arith.andi %91, %95 : vector<1x512xi1>
    %c0_i32_38 = arith.constant 0 : i32
    %97 = vector.broadcast %c0_i32_38 : i32 to vector<1x512xi32>
    %98 = arith.addi %0, %97 : vector<1x512xi32>
    %c0_i32_39 = arith.constant 0 : i32
    %99 = vector.broadcast %c0_i32_39 : i32 to vector<1x512xi32>
    %100 = arith.cmpi sge, %98, %99 : vector<1x512xi32>
    %c0_i32_40 = arith.constant 0 : i32
    %101 = vector.broadcast %c0_i32_40 : i32 to vector<1x512xi32>
    %102 = arith.addi %0, %101 : vector<1x512xi32>
    %c16_i32_41 = arith.constant 16 : i32
    %103 = vector.broadcast %c16_i32_41 : i32 to vector<1x512xi32>
    %104 = arith.cmpi slt, %102, %103 : vector<1x512xi32>
    %105 = arith.andi %100, %104 : vector<1x512xi1>
    %c1_i32_42 = arith.constant 1 : i32
    %106 = vector.broadcast %c1_i32_42 : i32 to vector<1x512xi32>
    %107 = arith.addi %1, %106 : vector<1x512xi32>
    %c0_i32_43 = arith.constant 0 : i32
    %108 = vector.broadcast %c0_i32_43 : i32 to vector<1x512xi32>
    %109 = arith.cmpi sge, %107, %108 : vector<1x512xi32>
    %110 = arith.andi %105, %109 : vector<1x512xi1>
    %c1_i32_44 = arith.constant 1 : i32
    %111 = vector.broadcast %c1_i32_44 : i32 to vector<1x512xi32>
    %112 = arith.addi %1, %111 : vector<1x512xi32>
    %c16_i32_45 = arith.constant 16 : i32
    %113 = vector.broadcast %c16_i32_45 : i32 to vector<1x512xi32>
    %114 = arith.cmpi slt, %112, %113 : vector<1x512xi32>
    %115 = arith.andi %110, %114 : vector<1x512xi1>
    %c0_i32_46 = arith.constant 0 : i32
    %116 = vector.broadcast %c0_i32_46 : i32 to vector<1x512xi32>
    %117 = arith.addi %0, %116 : vector<1x512xi32>
    %c0_i32_47 = arith.constant 0 : i32
    %118 = vector.broadcast %c0_i32_47 : i32 to vector<1x512xi32>
    %119 = arith.cmpi sge, %117, %118 : vector<1x512xi32>
    %c0_i32_48 = arith.constant 0 : i32
    %120 = vector.broadcast %c0_i32_48 : i32 to vector<1x512xi32>
    %121 = arith.addi %0, %120 : vector<1x512xi32>
    %c16_i32_49 = arith.constant 16 : i32
    %122 = vector.broadcast %c16_i32_49 : i32 to vector<1x512xi32>
    %123 = arith.cmpi slt, %121, %122 : vector<1x512xi32>
    %124 = arith.andi %119, %123 : vector<1x512xi1>
    %c2_i32_50 = arith.constant 2 : i32
    %125 = vector.broadcast %c2_i32_50 : i32 to vector<1x512xi32>
    %126 = arith.addi %1, %125 : vector<1x512xi32>
    %c0_i32_51 = arith.constant 0 : i32
    %127 = vector.broadcast %c0_i32_51 : i32 to vector<1x512xi32>
    %128 = arith.cmpi sge, %126, %127 : vector<1x512xi32>
    %129 = arith.andi %124, %128 : vector<1x512xi1>
    %c2_i32_52 = arith.constant 2 : i32
    %130 = vector.broadcast %c2_i32_52 : i32 to vector<1x512xi32>
    %131 = arith.addi %1, %130 : vector<1x512xi32>
    %c16_i32_53 = arith.constant 16 : i32
    %132 = vector.broadcast %c16_i32_53 : i32 to vector<1x512xi32>
    %133 = arith.cmpi slt, %131, %132 : vector<1x512xi32>
    %134 = arith.andi %129, %133 : vector<1x512xi1>
    %c1_i32_54 = arith.constant 1 : i32
    %135 = vector.broadcast %c1_i32_54 : i32 to vector<1x512xi32>
    %136 = arith.addi %0, %135 : vector<1x512xi32>
    %c0_i32_55 = arith.constant 0 : i32
    %137 = vector.broadcast %c0_i32_55 : i32 to vector<1x512xi32>
    %138 = arith.cmpi sge, %136, %137 : vector<1x512xi32>
    %c1_i32_56 = arith.constant 1 : i32
    %139 = vector.broadcast %c1_i32_56 : i32 to vector<1x512xi32>
    %140 = arith.addi %0, %139 : vector<1x512xi32>
    %c16_i32_57 = arith.constant 16 : i32
    %141 = vector.broadcast %c16_i32_57 : i32 to vector<1x512xi32>
    %142 = arith.cmpi slt, %140, %141 : vector<1x512xi32>
    %143 = arith.andi %138, %142 : vector<1x512xi1>
    %c-1_i32_58 = arith.constant -1 : i32
    %144 = vector.broadcast %c-1_i32_58 : i32 to vector<1x512xi32>
    %145 = arith.addi %1, %144 : vector<1x512xi32>
    %c0_i32_59 = arith.constant 0 : i32
    %146 = vector.broadcast %c0_i32_59 : i32 to vector<1x512xi32>
    %147 = arith.cmpi sge, %145, %146 : vector<1x512xi32>
    %148 = arith.andi %143, %147 : vector<1x512xi1>
    %c-1_i32_60 = arith.constant -1 : i32
    %149 = vector.broadcast %c-1_i32_60 : i32 to vector<1x512xi32>
    %150 = arith.addi %1, %149 : vector<1x512xi32>
    %c16_i32_61 = arith.constant 16 : i32
    %151 = vector.broadcast %c16_i32_61 : i32 to vector<1x512xi32>
    %152 = arith.cmpi slt, %150, %151 : vector<1x512xi32>
    %153 = arith.andi %148, %152 : vector<1x512xi1>
    %c1_i32_62 = arith.constant 1 : i32
    %154 = vector.broadcast %c1_i32_62 : i32 to vector<1x512xi32>
    %155 = arith.addi %0, %154 : vector<1x512xi32>
    %c0_i32_63 = arith.constant 0 : i32
    %156 = vector.broadcast %c0_i32_63 : i32 to vector<1x512xi32>
    %157 = arith.cmpi sge, %155, %156 : vector<1x512xi32>
    %c1_i32_64 = arith.constant 1 : i32
    %158 = vector.broadcast %c1_i32_64 : i32 to vector<1x512xi32>
    %159 = arith.addi %0, %158 : vector<1x512xi32>
    %c16_i32_65 = arith.constant 16 : i32
    %160 = vector.broadcast %c16_i32_65 : i32 to vector<1x512xi32>
    %161 = arith.cmpi slt, %159, %160 : vector<1x512xi32>
    %162 = arith.andi %157, %161 : vector<1x512xi1>
    %c0_i32_66 = arith.constant 0 : i32
    %163 = vector.broadcast %c0_i32_66 : i32 to vector<1x512xi32>
    %164 = arith.addi %1, %163 : vector<1x512xi32>
    %c0_i32_67 = arith.constant 0 : i32
    %165 = vector.broadcast %c0_i32_67 : i32 to vector<1x512xi32>
    %166 = arith.cmpi sge, %164, %165 : vector<1x512xi32>
    %167 = arith.andi %162, %166 : vector<1x512xi1>
    %c0_i32_68 = arith.constant 0 : i32
    %168 = vector.broadcast %c0_i32_68 : i32 to vector<1x512xi32>
    %169 = arith.addi %1, %168 : vector<1x512xi32>
    %c16_i32_69 = arith.constant 16 : i32
    %170 = vector.broadcast %c16_i32_69 : i32 to vector<1x512xi32>
    %171 = arith.cmpi slt, %169, %170 : vector<1x512xi32>
    %172 = arith.andi %167, %171 : vector<1x512xi1>
    %c1_i32_70 = arith.constant 1 : i32
    %173 = vector.broadcast %c1_i32_70 : i32 to vector<1x512xi32>
    %174 = arith.addi %0, %173 : vector<1x512xi32>
    %c0_i32_71 = arith.constant 0 : i32
    %175 = vector.broadcast %c0_i32_71 : i32 to vector<1x512xi32>
    %176 = arith.cmpi sge, %174, %175 : vector<1x512xi32>
    %c1_i32_72 = arith.constant 1 : i32
    %177 = vector.broadcast %c1_i32_72 : i32 to vector<1x512xi32>
    %178 = arith.addi %0, %177 : vector<1x512xi32>
    %c16_i32_73 = arith.constant 16 : i32
    %179 = vector.broadcast %c16_i32_73 : i32 to vector<1x512xi32>
    %180 = arith.cmpi slt, %178, %179 : vector<1x512xi32>
    %181 = arith.andi %176, %180 : vector<1x512xi1>
    %c1_i32_74 = arith.constant 1 : i32
    %182 = vector.broadcast %c1_i32_74 : i32 to vector<1x512xi32>
    %183 = arith.addi %1, %182 : vector<1x512xi32>
    %c0_i32_75 = arith.constant 0 : i32
    %184 = vector.broadcast %c0_i32_75 : i32 to vector<1x512xi32>
    %185 = arith.cmpi sge, %183, %184 : vector<1x512xi32>
    %186 = arith.andi %181, %185 : vector<1x512xi1>
    %c1_i32_76 = arith.constant 1 : i32
    %187 = vector.broadcast %c1_i32_76 : i32 to vector<1x512xi32>
    %188 = arith.addi %1, %187 : vector<1x512xi32>
    %c16_i32_77 = arith.constant 16 : i32
    %189 = vector.broadcast %c16_i32_77 : i32 to vector<1x512xi32>
    %190 = arith.cmpi slt, %188, %189 : vector<1x512xi32>
    %191 = arith.andi %186, %190 : vector<1x512xi1>
    %c1_i32_78 = arith.constant 1 : i32
    %192 = vector.broadcast %c1_i32_78 : i32 to vector<1x512xi32>
    %193 = arith.addi %0, %192 : vector<1x512xi32>
    %c0_i32_79 = arith.constant 0 : i32
    %194 = vector.broadcast %c0_i32_79 : i32 to vector<1x512xi32>
    %195 = arith.cmpi sge, %193, %194 : vector<1x512xi32>
    %c1_i32_80 = arith.constant 1 : i32
    %196 = vector.broadcast %c1_i32_80 : i32 to vector<1x512xi32>
    %197 = arith.addi %0, %196 : vector<1x512xi32>
    %c16_i32_81 = arith.constant 16 : i32
    %198 = vector.broadcast %c16_i32_81 : i32 to vector<1x512xi32>
    %199 = arith.cmpi slt, %197, %198 : vector<1x512xi32>
    %200 = arith.andi %195, %199 : vector<1x512xi1>
    %c2_i32_82 = arith.constant 2 : i32
    %201 = vector.broadcast %c2_i32_82 : i32 to vector<1x512xi32>
    %202 = arith.addi %1, %201 : vector<1x512xi32>
    %c0_i32_83 = arith.constant 0 : i32
    %203 = vector.broadcast %c0_i32_83 : i32 to vector<1x512xi32>
    %204 = arith.cmpi sge, %202, %203 : vector<1x512xi32>
    %205 = arith.andi %200, %204 : vector<1x512xi1>
    %c2_i32_84 = arith.constant 2 : i32
    %206 = vector.broadcast %c2_i32_84 : i32 to vector<1x512xi32>
    %207 = arith.addi %1, %206 : vector<1x512xi32>
    %c16_i32_85 = arith.constant 16 : i32
    %208 = vector.broadcast %c16_i32_85 : i32 to vector<1x512xi32>
    %209 = arith.cmpi slt, %207, %208 : vector<1x512xi32>
    %210 = arith.andi %205, %209 : vector<1x512xi1>
    %c2_i32_86 = arith.constant 2 : i32
    %211 = vector.broadcast %c2_i32_86 : i32 to vector<1x512xi32>
    %212 = arith.addi %0, %211 : vector<1x512xi32>
    %c0_i32_87 = arith.constant 0 : i32
    %213 = vector.broadcast %c0_i32_87 : i32 to vector<1x512xi32>
    %214 = arith.cmpi sge, %212, %213 : vector<1x512xi32>
    %c2_i32_88 = arith.constant 2 : i32
    %215 = vector.broadcast %c2_i32_88 : i32 to vector<1x512xi32>
    %216 = arith.addi %0, %215 : vector<1x512xi32>
    %c16_i32_89 = arith.constant 16 : i32
    %217 = vector.broadcast %c16_i32_89 : i32 to vector<1x512xi32>
    %218 = arith.cmpi slt, %216, %217 : vector<1x512xi32>
    %219 = arith.andi %214, %218 : vector<1x512xi1>
    %c-1_i32_90 = arith.constant -1 : i32
    %220 = vector.broadcast %c-1_i32_90 : i32 to vector<1x512xi32>
    %221 = arith.addi %1, %220 : vector<1x512xi32>
    %c0_i32_91 = arith.constant 0 : i32
    %222 = vector.broadcast %c0_i32_91 : i32 to vector<1x512xi32>
    %223 = arith.cmpi sge, %221, %222 : vector<1x512xi32>
    %224 = arith.andi %219, %223 : vector<1x512xi1>
    %c-1_i32_92 = arith.constant -1 : i32
    %225 = vector.broadcast %c-1_i32_92 : i32 to vector<1x512xi32>
    %226 = arith.addi %1, %225 : vector<1x512xi32>
    %c16_i32_93 = arith.constant 16 : i32
    %227 = vector.broadcast %c16_i32_93 : i32 to vector<1x512xi32>
    %228 = arith.cmpi slt, %226, %227 : vector<1x512xi32>
    %229 = arith.andi %224, %228 : vector<1x512xi1>
    %c2_i32_94 = arith.constant 2 : i32
    %230 = vector.broadcast %c2_i32_94 : i32 to vector<1x512xi32>
    %231 = arith.addi %0, %230 : vector<1x512xi32>
    %c0_i32_95 = arith.constant 0 : i32
    %232 = vector.broadcast %c0_i32_95 : i32 to vector<1x512xi32>
    %233 = arith.cmpi sge, %231, %232 : vector<1x512xi32>
    %c2_i32_96 = arith.constant 2 : i32
    %234 = vector.broadcast %c2_i32_96 : i32 to vector<1x512xi32>
    %235 = arith.addi %0, %234 : vector<1x512xi32>
    %c16_i32_97 = arith.constant 16 : i32
    %236 = vector.broadcast %c16_i32_97 : i32 to vector<1x512xi32>
    %237 = arith.cmpi slt, %235, %236 : vector<1x512xi32>
    %238 = arith.andi %233, %237 : vector<1x512xi1>
    %c0_i32_98 = arith.constant 0 : i32
    %239 = vector.broadcast %c0_i32_98 : i32 to vector<1x512xi32>
    %240 = arith.addi %1, %239 : vector<1x512xi32>
    %c0_i32_99 = arith.constant 0 : i32
    %241 = vector.broadcast %c0_i32_99 : i32 to vector<1x512xi32>
    %242 = arith.cmpi sge, %240, %241 : vector<1x512xi32>
    %243 = arith.andi %238, %242 : vector<1x512xi1>
    %c0_i32_100 = arith.constant 0 : i32
    %244 = vector.broadcast %c0_i32_100 : i32 to vector<1x512xi32>
    %245 = arith.addi %1, %244 : vector<1x512xi32>
    %c16_i32_101 = arith.constant 16 : i32
    %246 = vector.broadcast %c16_i32_101 : i32 to vector<1x512xi32>
    %247 = arith.cmpi slt, %245, %246 : vector<1x512xi32>
    %248 = arith.andi %243, %247 : vector<1x512xi1>
    %c2_i32_102 = arith.constant 2 : i32
    %249 = vector.broadcast %c2_i32_102 : i32 to vector<1x512xi32>
    %250 = arith.addi %0, %249 : vector<1x512xi32>
    %c0_i32_103 = arith.constant 0 : i32
    %251 = vector.broadcast %c0_i32_103 : i32 to vector<1x512xi32>
    %252 = arith.cmpi sge, %250, %251 : vector<1x512xi32>
    %c2_i32_104 = arith.constant 2 : i32
    %253 = vector.broadcast %c2_i32_104 : i32 to vector<1x512xi32>
    %254 = arith.addi %0, %253 : vector<1x512xi32>
    %c16_i32_105 = arith.constant 16 : i32
    %255 = vector.broadcast %c16_i32_105 : i32 to vector<1x512xi32>
    %256 = arith.cmpi slt, %254, %255 : vector<1x512xi32>
    %257 = arith.andi %252, %256 : vector<1x512xi1>
    %c1_i32_106 = arith.constant 1 : i32
    %258 = vector.broadcast %c1_i32_106 : i32 to vector<1x512xi32>
    %259 = arith.addi %1, %258 : vector<1x512xi32>
    %c0_i32_107 = arith.constant 0 : i32
    %260 = vector.broadcast %c0_i32_107 : i32 to vector<1x512xi32>
    %261 = arith.cmpi sge, %259, %260 : vector<1x512xi32>
    %262 = arith.andi %257, %261 : vector<1x512xi1>
    %c1_i32_108 = arith.constant 1 : i32
    %263 = vector.broadcast %c1_i32_108 : i32 to vector<1x512xi32>
    %264 = arith.addi %1, %263 : vector<1x512xi32>
    %c16_i32_109 = arith.constant 16 : i32
    %265 = vector.broadcast %c16_i32_109 : i32 to vector<1x512xi32>
    %266 = arith.cmpi slt, %264, %265 : vector<1x512xi32>
    %267 = arith.andi %262, %266 : vector<1x512xi1>
    %c2_i32_110 = arith.constant 2 : i32
    %268 = vector.broadcast %c2_i32_110 : i32 to vector<1x512xi32>
    %269 = arith.addi %0, %268 : vector<1x512xi32>
    %c0_i32_111 = arith.constant 0 : i32
    %270 = vector.broadcast %c0_i32_111 : i32 to vector<1x512xi32>
    %271 = arith.cmpi sge, %269, %270 : vector<1x512xi32>
    %c2_i32_112 = arith.constant 2 : i32
    %272 = vector.broadcast %c2_i32_112 : i32 to vector<1x512xi32>
    %273 = arith.addi %0, %272 : vector<1x512xi32>
    %c16_i32_113 = arith.constant 16 : i32
    %274 = vector.broadcast %c16_i32_113 : i32 to vector<1x512xi32>
    %275 = arith.cmpi slt, %273, %274 : vector<1x512xi32>
    %276 = arith.andi %271, %275 : vector<1x512xi1>
    %c2_i32_114 = arith.constant 2 : i32
    %277 = vector.broadcast %c2_i32_114 : i32 to vector<1x512xi32>
    %278 = arith.addi %1, %277 : vector<1x512xi32>
    %c0_i32_115 = arith.constant 0 : i32
    %279 = vector.broadcast %c0_i32_115 : i32 to vector<1x512xi32>
    %280 = arith.cmpi sge, %278, %279 : vector<1x512xi32>
    %281 = arith.andi %276, %280 : vector<1x512xi1>
    %c2_i32_116 = arith.constant 2 : i32
    %282 = vector.broadcast %c2_i32_116 : i32 to vector<1x512xi32>
    %283 = arith.addi %1, %282 : vector<1x512xi32>
    %c16_i32_117 = arith.constant 16 : i32
    %284 = vector.broadcast %c16_i32_117 : i32 to vector<1x512xi32>
    %285 = arith.cmpi slt, %283, %284 : vector<1x512xi32>
    %286 = arith.andi %281, %285 : vector<1x512xi1>
    %c0_118 = arith.constant 0 : index
    %c0_119 = arith.constant 0 : index
    %287 = vector.load %arg5[%c0_118, %c0_119] : memref<8x32xf32, #tpu.memory_space<vmem>>, vector<8x32xf32>
    %c0_120 = arith.constant 0 : index
    %c0_121 = arith.constant 0 : index
    %288 = vector.load %arg1[%c0_120, %c0_121] : memref<32x2xf32, #tpu.memory_space<vmem>>, vector<32x2xf32>
    %cst = arith.constant dense<0.000000e+00> : vector<8x2xf32>
    %289 = tpu.matmul %287, %288, %cst {dimension_numbers = #tpu.dot_dimension_numbers<[1], [0], [0], [1], [0, 0, 1, 1], [], []>} : vector<8x32xf32>, vector<32x2xf32>, vector<8x2xf32> -> vector<8x2xf32>
    %c0_122 = arith.constant 0 : index
    %c0_123 = arith.constant 0 : index
    %290 = vector.load %arg6[%c0_122, %c0_123] : memref<8x1xf32, #tpu.memory_space<vmem>>, vector<8x1xf32>
    %291 = vector.broadcast %290 : vector<8x1xf32> to vector<8x2xf32>
    %292 = arith.addf %289, %291 : vector<8x2xf32>
    %cst_124 = arith.constant 0.000000e+00 : f32
    %293 = vector.broadcast %cst_124 : f32 to vector<8x2xf32>
    %294 = arith.maximumf %292, %293 : vector<8x2xf32>
    %c0_125 = arith.constant 0 : index
    %c0_126 = arith.constant 0 : index
    %295 = vector.load %arg2[%c0_125, %c0_126] : memref<2x512xf32, #tpu.memory_space<vmem>>, vector<2x512xf32>
    %cst_127 = arith.constant dense<0.000000e+00> : vector<8x512xf32>
    %296 = tpu.matmul %294, %295, %cst_127 {dimension_numbers = #tpu.dot_dimension_numbers<[1], [0], [0], [1], [0, 0, 1, 1], [], []>} : vector<8x2xf32>, vector<2x512xf32>, vector<8x512xf32> -> vector<8x512xf32>
    %c0_128 = arith.constant 0 : index
    %c0_129 = arith.constant 0 : index
    %297 = vector.load %arg0[%c0_128, %c0_129] : memref<8x512xf32, #tpu.memory_space<vmem>>, vector<8x512xf32>
    %c17_i32 = arith.constant 17 : i32
    %298 = tpu.dynamic_rotate %297 by %c17_i32 dim 1 : vector<8x512xf32>, i32 -> vector<8x512xf32>
    %cst_130 = arith.constant 0.000000e+00 : f32
    %299 = vector.shape_cast %20 : vector<1x512xi1> to vector<1x512xi1>
    %300 = vector.broadcast %299 : vector<1x512xi1> to vector<8x512xi1>
    %301 = vector.broadcast %cst_130 : f32 to vector<8x512xf32>
    %302 = arith.select %300, %298, %301 : vector<8x512xi1>, vector<8x512xf32>
    %c16_i32_131 = arith.constant 16 : i32
    %303 = tpu.dynamic_rotate %297 by %c16_i32_131 dim 1 : vector<8x512xf32>, i32 -> vector<8x512xf32>
    %cst_132 = arith.constant 0.000000e+00 : f32
    %304 = vector.shape_cast %39 : vector<1x512xi1> to vector<1x512xi1>
    %305 = vector.broadcast %304 : vector<1x512xi1> to vector<8x512xi1>
    %306 = vector.broadcast %cst_132 : f32 to vector<8x512xf32>
    %307 = arith.select %305, %303, %306 : vector<8x512xi1>, vector<8x512xf32>
    %c15_i32 = arith.constant 15 : i32
    %308 = tpu.dynamic_rotate %297 by %c15_i32 dim 1 : vector<8x512xf32>, i32 -> vector<8x512xf32>
    %cst_133 = arith.constant 0.000000e+00 : f32
    %309 = vector.shape_cast %58 : vector<1x512xi1> to vector<1x512xi1>
    %310 = vector.broadcast %309 : vector<1x512xi1> to vector<8x512xi1>
    %311 = vector.broadcast %cst_133 : f32 to vector<8x512xf32>
    %312 = arith.select %310, %308, %311 : vector<8x512xi1>, vector<8x512xf32>
    %c1_i32_134 = arith.constant 1 : i32
    %313 = tpu.dynamic_rotate %297 by %c1_i32_134 dim 1 : vector<8x512xf32>, i32 -> vector<8x512xf32>
    %cst_135 = arith.constant 0.000000e+00 : f32
    %314 = vector.shape_cast %96 : vector<1x512xi1> to vector<1x512xi1>
    %315 = vector.broadcast %314 : vector<1x512xi1> to vector<8x512xi1>
    %316 = vector.broadcast %cst_135 : f32 to vector<8x512xf32>
    %317 = arith.select %315, %313, %316 : vector<8x512xi1>, vector<8x512xf32>
    %c511_i32 = arith.constant 511 : i32
    %318 = tpu.dynamic_rotate %297 by %c511_i32 dim 1 : vector<8x512xf32>, i32 -> vector<8x512xf32>
    %cst_136 = arith.constant 0.000000e+00 : f32
    %319 = vector.shape_cast %115 : vector<1x512xi1> to vector<1x512xi1>
    %320 = vector.broadcast %319 : vector<1x512xi1> to vector<8x512xi1>
    %321 = vector.broadcast %cst_136 : f32 to vector<8x512xf32>
    %322 = arith.select %320, %318, %321 : vector<8x512xi1>, vector<8x512xf32>
    %c497_i32 = arith.constant 497 : i32
    %323 = tpu.dynamic_rotate %297 by %c497_i32 dim 1 : vector<8x512xf32>, i32 -> vector<8x512xf32>
    %cst_137 = arith.constant 0.000000e+00 : f32
    %324 = vector.shape_cast %153 : vector<1x512xi1> to vector<1x512xi1>
    %325 = vector.broadcast %324 : vector<1x512xi1> to vector<8x512xi1>
    %326 = vector.broadcast %cst_137 : f32 to vector<8x512xf32>
    %327 = arith.select %325, %323, %326 : vector<8x512xi1>, vector<8x512xf32>
    %c496_i32 = arith.constant 496 : i32
    %328 = tpu.dynamic_rotate %297 by %c496_i32 dim 1 : vector<8x512xf32>, i32 -> vector<8x512xf32>
    %cst_138 = arith.constant 0.000000e+00 : f32
    %329 = vector.shape_cast %172 : vector<1x512xi1> to vector<1x512xi1>
    %330 = vector.broadcast %329 : vector<1x512xi1> to vector<8x512xi1>
    %331 = vector.broadcast %cst_138 : f32 to vector<8x512xf32>
    %332 = arith.select %330, %328, %331 : vector<8x512xi1>, vector<8x512xf32>
    %c495_i32 = arith.constant 495 : i32
    %333 = tpu.dynamic_rotate %297 by %c495_i32 dim 1 : vector<8x512xf32>, i32 -> vector<8x512xf32>
    %cst_139 = arith.constant 0.000000e+00 : f32
    %334 = vector.shape_cast %191 : vector<1x512xi1> to vector<1x512xi1>
    %335 = vector.broadcast %334 : vector<1x512xi1> to vector<8x512xi1>
    %336 = vector.broadcast %cst_139 : f32 to vector<8x512xf32>
    %337 = arith.select %335, %333, %336 : vector<8x512xi1>, vector<8x512xf32>
    %338 = tpu.concatenate %302, %307, %312, %317, %297, %322, %327, %332, %337 in 0 : vector<8x512xf32>, vector<8x512xf32>, vector<8x512xf32>, vector<8x512xf32>, vector<8x512xf32>, vector<8x512xf32>, vector<8x512xf32>, vector<8x512xf32>, vector<8x512xf32> -> vector<72x512xf32>
    %c0_140 = arith.constant 0 : index
    %c0_141 = arith.constant 0 : index
    %339 = vector.load %arg7[%c0_140, %c0_141] : memref<8x72xf32, #tpu.memory_space<vmem>>, vector<8x72xf32>
    %cst_142 = arith.constant dense<0.000000e+00> : vector<8x512xf32>
    %340 = tpu.matmul %339, %338, %cst_142 {dimension_numbers = #tpu.dot_dimension_numbers<[1], [0], [0], [1], [0, 0, 1, 1], [], []>} : vector<8x72xf32>, vector<72x512xf32>, vector<8x512xf32> -> vector<8x512xf32>
    %c0_143 = arith.constant 0 : index
    %c0_144 = arith.constant 0 : index
    %341 = vector.load %arg8[%c0_143, %c0_144] : memref<8x1xf32, #tpu.memory_space<vmem>>, vector<8x1xf32>
    %342 = vector.broadcast %341 : vector<8x1xf32> to vector<8x512xf32>
    %343 = arith.addf %340, %342 : vector<8x512xf32>
    %cst_145 = arith.constant 0.000000e+00 : f32
    %344 = vector.broadcast %cst_145 : f32 to vector<8x512xf32>
    %345 = arith.maximumf %343, %344 : vector<8x512xf32>
    %c0_146 = arith.constant 0 : index
    %c0_147 = arith.constant 0 : index
    %346 = vector.load %arg9[%c0_146, %c0_147] : memref<8x1xf32, #tpu.memory_space<vmem>>, vector<8x1xf32>
    %c0_148 = arith.constant 0 : index
    %c0_149 = arith.constant 0 : index
    %347 = vector.load %arg10[%c0_148, %c0_149] : memref<8x1xf32, #tpu.memory_space<vmem>>, vector<8x1xf32>
    %cst_150 = arith.constant dense<0.000000e+00> : vector<8xf32>
    %348 = vector.multi_reduction <add>, %345, %cst_150 [1] : vector<8x512xf32> to vector<8xf32>
    %349 = vector.shape_cast %348 : vector<8xf32> to vector<8x1xf32>
    %cst_151 = arith.constant 5.120000e+02 : f32
    %350 = vector.broadcast %cst_151 : f32 to vector<8x1xf32>
    %351 = arith.divf %349, %350 : vector<8x1xf32>
    %352 = vector.broadcast %351 : vector<8x1xf32> to vector<8x512xf32>
    %353 = arith.subf %345, %352 : vector<8x512xf32>
    %354 = vector.broadcast %351 : vector<8x1xf32> to vector<8x512xf32>
    %355 = arith.subf %345, %354 : vector<8x512xf32>
    %356 = arith.mulf %353, %355 : vector<8x512xf32>
    %cst_152 = arith.constant dense<0.000000e+00> : vector<8xf32>
    %357 = vector.multi_reduction <add>, %356, %cst_152 [1] : vector<8x512xf32> to vector<8xf32>
    %358 = vector.shape_cast %357 : vector<8xf32> to vector<8x1xf32>
    %cst_153 = arith.constant 5.120000e+02 : f32
    %359 = vector.broadcast %cst_153 : f32 to vector<8x1xf32>
    %360 = arith.divf %358, %359 : vector<8x1xf32>
    %361 = vector.broadcast %351 : vector<8x1xf32> to vector<8x512xf32>
    %362 = arith.subf %345, %361 : vector<8x512xf32>
    %cst_154 = arith.constant 9.99999974E-6 : f32
    %363 = vector.broadcast %cst_154 : f32 to vector<8x1xf32>
    %364 = arith.addf %360, %363 : vector<8x1xf32>
    %365 = math.rsqrt %364 : vector<8x1xf32>
    %366 = vector.broadcast %365 : vector<8x1xf32> to vector<8x512xf32>
    %367 = arith.mulf %362, %366 : vector<8x512xf32>
    %368 = vector.broadcast %346 : vector<8x1xf32> to vector<8x512xf32>
    %369 = arith.mulf %367, %368 : vector<8x512xf32>
    %370 = vector.broadcast %347 : vector<8x1xf32> to vector<8x512xf32>
    %371 = arith.addf %369, %370 : vector<8x512xf32>
    %372 = arith.addf %371, %296 : vector<8x512xf32>
    %c17_i32_155 = arith.constant 17 : i32
    %373 = tpu.dynamic_rotate %372 by %c17_i32_155 dim 1 : vector<8x512xf32>, i32 -> vector<8x512xf32>
    %cst_156 = arith.constant 0.000000e+00 : f32
    %374 = vector.shape_cast %20 : vector<1x512xi1> to vector<1x512xi1>
    %375 = vector.broadcast %374 : vector<1x512xi1> to vector<8x512xi1>
    %376 = vector.broadcast %cst_156 : f32 to vector<8x512xf32>
    %377 = arith.select %375, %373, %376 : vector<8x512xi1>, vector<8x512xf32>
    %c16_i32_157 = arith.constant 16 : i32
    %378 = tpu.dynamic_rotate %372 by %c16_i32_157 dim 1 : vector<8x512xf32>, i32 -> vector<8x512xf32>
    %cst_158 = arith.constant 0.000000e+00 : f32
    %379 = vector.shape_cast %39 : vector<1x512xi1> to vector<1x512xi1>
    %380 = vector.broadcast %379 : vector<1x512xi1> to vector<8x512xi1>
    %381 = vector.broadcast %cst_158 : f32 to vector<8x512xf32>
    %382 = arith.select %380, %378, %381 : vector<8x512xi1>, vector<8x512xf32>
    %c15_i32_159 = arith.constant 15 : i32
    %383 = tpu.dynamic_rotate %372 by %c15_i32_159 dim 1 : vector<8x512xf32>, i32 -> vector<8x512xf32>
    %cst_160 = arith.constant 0.000000e+00 : f32
    %384 = vector.shape_cast %58 : vector<1x512xi1> to vector<1x512xi1>
    %385 = vector.broadcast %384 : vector<1x512xi1> to vector<8x512xi1>
    %386 = vector.broadcast %cst_160 : f32 to vector<8x512xf32>
    %387 = arith.select %385, %383, %386 : vector<8x512xi1>, vector<8x512xf32>
    %c1_i32_161 = arith.constant 1 : i32
    %388 = tpu.dynamic_rotate %372 by %c1_i32_161 dim 1 : vector<8x512xf32>, i32 -> vector<8x512xf32>
    %cst_162 = arith.constant 0.000000e+00 : f32
    %389 = vector.shape_cast %96 : vector<1x512xi1> to vector<1x512xi1>
    %390 = vector.broadcast %389 : vector<1x512xi1> to vector<8x512xi1>
    %391 = vector.broadcast %cst_162 : f32 to vector<8x512xf32>
    %392 = arith.select %390, %388, %391 : vector<8x512xi1>, vector<8x512xf32>
    %c511_i32_163 = arith.constant 511 : i32
    %393 = tpu.dynamic_rotate %372 by %c511_i32_163 dim 1 : vector<8x512xf32>, i32 -> vector<8x512xf32>
    %cst_164 = arith.constant 0.000000e+00 : f32
    %394 = vector.shape_cast %115 : vector<1x512xi1> to vector<1x512xi1>
    %395 = vector.broadcast %394 : vector<1x512xi1> to vector<8x512xi1>
    %396 = vector.broadcast %cst_164 : f32 to vector<8x512xf32>
    %397 = arith.select %395, %393, %396 : vector<8x512xi1>, vector<8x512xf32>
    %c497_i32_165 = arith.constant 497 : i32
    %398 = tpu.dynamic_rotate %372 by %c497_i32_165 dim 1 : vector<8x512xf32>, i32 -> vector<8x512xf32>
    %cst_166 = arith.constant 0.000000e+00 : f32
    %399 = vector.shape_cast %153 : vector<1x512xi1> to vector<1x512xi1>
    %400 = vector.broadcast %399 : vector<1x512xi1> to vector<8x512xi1>
    %401 = vector.broadcast %cst_166 : f32 to vector<8x512xf32>
    %402 = arith.select %400, %398, %401 : vector<8x512xi1>, vector<8x512xf32>
    %c496_i32_167 = arith.constant 496 : i32
    %403 = tpu.dynamic_rotate %372 by %c496_i32_167 dim 1 : vector<8x512xf32>, i32 -> vector<8x512xf32>
    %cst_168 = arith.constant 0.000000e+00 : f32
    %404 = vector.shape_cast %172 : vector<1x512xi1> to vector<1x512xi1>
    %405 = vector.broadcast %404 : vector<1x512xi1> to vector<8x512xi1>
    %406 = vector.broadcast %cst_168 : f32 to vector<8x512xf32>
    %407 = arith.select %405, %403, %406 : vector<8x512xi1>, vector<8x512xf32>
    %c495_i32_169 = arith.constant 495 : i32
    %408 = tpu.dynamic_rotate %372 by %c495_i32_169 dim 1 : vector<8x512xf32>, i32 -> vector<8x512xf32>
    %cst_170 = arith.constant 0.000000e+00 : f32
    %409 = vector.shape_cast %191 : vector<1x512xi1> to vector<1x512xi1>
    %410 = vector.broadcast %409 : vector<1x512xi1> to vector<8x512xi1>
    %411 = vector.broadcast %cst_170 : f32 to vector<8x512xf32>
    %412 = arith.select %410, %408, %411 : vector<8x512xi1>, vector<8x512xf32>
    %413 = tpu.concatenate %377, %382, %387, %392, %372, %397, %402, %407, %412 in 0 : vector<8x512xf32>, vector<8x512xf32>, vector<8x512xf32>, vector<8x512xf32>, vector<8x512xf32>, vector<8x512xf32>, vector<8x512xf32>, vector<8x512xf32>, vector<8x512xf32> -> vector<72x512xf32>
    %c0_171 = arith.constant 0 : index
    %c0_172 = arith.constant 0 : index
    %414 = vector.load %arg11[%c0_171, %c0_172] : memref<8x72xf32, #tpu.memory_space<vmem>>, vector<8x72xf32>
    %cst_173 = arith.constant dense<0.000000e+00> : vector<8x512xf32>
    %415 = tpu.matmul %414, %413, %cst_173 {dimension_numbers = #tpu.dot_dimension_numbers<[1], [0], [0], [1], [0, 0, 1, 1], [], []>} : vector<8x72xf32>, vector<72x512xf32>, vector<8x512xf32> -> vector<8x512xf32>
    %c0_174 = arith.constant 0 : index
    %c0_175 = arith.constant 0 : index
    %416 = vector.load %arg12[%c0_174, %c0_175] : memref<8x1xf32, #tpu.memory_space<vmem>>, vector<8x1xf32>
    %417 = vector.broadcast %416 : vector<8x1xf32> to vector<8x512xf32>
    %418 = arith.addf %415, %417 : vector<8x512xf32>
    %cst_176 = arith.constant 0.000000e+00 : f32
    %419 = vector.broadcast %cst_176 : f32 to vector<8x512xf32>
    %420 = arith.maximumf %418, %419 : vector<8x512xf32>
    %c0_177 = arith.constant 0 : index
    %c0_178 = arith.constant 0 : index
    %421 = vector.load %arg13[%c0_177, %c0_178] : memref<8x1xf32, #tpu.memory_space<vmem>>, vector<8x1xf32>
    %c0_179 = arith.constant 0 : index
    %c0_180 = arith.constant 0 : index
    %422 = vector.load %arg14[%c0_179, %c0_180] : memref<8x1xf32, #tpu.memory_space<vmem>>, vector<8x1xf32>
    %cst_181 = arith.constant dense<0.000000e+00> : vector<8xf32>
    %423 = vector.multi_reduction <add>, %420, %cst_181 [1] : vector<8x512xf32> to vector<8xf32>
    %424 = vector.shape_cast %423 : vector<8xf32> to vector<8x1xf32>
    %cst_182 = arith.constant 5.120000e+02 : f32
    %425 = vector.broadcast %cst_182 : f32 to vector<8x1xf32>
    %426 = arith.divf %424, %425 : vector<8x1xf32>
    %427 = vector.broadcast %426 : vector<8x1xf32> to vector<8x512xf32>
    %428 = arith.subf %420, %427 : vector<8x512xf32>
    %429 = vector.broadcast %426 : vector<8x1xf32> to vector<8x512xf32>
    %430 = arith.subf %420, %429 : vector<8x512xf32>
    %431 = arith.mulf %428, %430 : vector<8x512xf32>
    %cst_183 = arith.constant dense<0.000000e+00> : vector<8xf32>
    %432 = vector.multi_reduction <add>, %431, %cst_183 [1] : vector<8x512xf32> to vector<8xf32>
    %433 = vector.shape_cast %432 : vector<8xf32> to vector<8x1xf32>
    %cst_184 = arith.constant 5.120000e+02 : f32
    %434 = vector.broadcast %cst_184 : f32 to vector<8x1xf32>
    %435 = arith.divf %433, %434 : vector<8x1xf32>
    %436 = vector.broadcast %426 : vector<8x1xf32> to vector<8x512xf32>
    %437 = arith.subf %420, %436 : vector<8x512xf32>
    %cst_185 = arith.constant 9.99999974E-6 : f32
    %438 = vector.broadcast %cst_185 : f32 to vector<8x1xf32>
    %439 = arith.addf %435, %438 : vector<8x1xf32>
    %440 = math.rsqrt %439 : vector<8x1xf32>
    %441 = vector.broadcast %440 : vector<8x1xf32> to vector<8x512xf32>
    %442 = arith.mulf %437, %441 : vector<8x512xf32>
    %443 = vector.broadcast %421 : vector<8x1xf32> to vector<8x512xf32>
    %444 = arith.mulf %442, %443 : vector<8x512xf32>
    %445 = vector.broadcast %422 : vector<8x1xf32> to vector<8x512xf32>
    %446 = arith.addf %444, %445 : vector<8x512xf32>
    %c17_i32_186 = arith.constant 17 : i32
    %447 = tpu.dynamic_rotate %446 by %c17_i32_186 dim 1 : vector<8x512xf32>, i32 -> vector<8x512xf32>
    %cst_187 = arith.constant 0.000000e+00 : f32
    %448 = vector.shape_cast %20 : vector<1x512xi1> to vector<1x512xi1>
    %449 = vector.broadcast %448 : vector<1x512xi1> to vector<8x512xi1>
    %450 = vector.broadcast %cst_187 : f32 to vector<8x512xf32>
    %451 = arith.select %449, %447, %450 : vector<8x512xi1>, vector<8x512xf32>
    %c16_i32_188 = arith.constant 16 : i32
    %452 = tpu.dynamic_rotate %446 by %c16_i32_188 dim 1 : vector<8x512xf32>, i32 -> vector<8x512xf32>
    %cst_189 = arith.constant 0.000000e+00 : f32
    %453 = vector.shape_cast %39 : vector<1x512xi1> to vector<1x512xi1>
    %454 = vector.broadcast %453 : vector<1x512xi1> to vector<8x512xi1>
    %455 = vector.broadcast %cst_189 : f32 to vector<8x512xf32>
    %456 = arith.select %454, %452, %455 : vector<8x512xi1>, vector<8x512xf32>
    %c15_i32_190 = arith.constant 15 : i32
    %457 = tpu.dynamic_rotate %446 by %c15_i32_190 dim 1 : vector<8x512xf32>, i32 -> vector<8x512xf32>
    %cst_191 = arith.constant 0.000000e+00 : f32
    %458 = vector.shape_cast %58 : vector<1x512xi1> to vector<1x512xi1>
    %459 = vector.broadcast %458 : vector<1x512xi1> to vector<8x512xi1>
    %460 = vector.broadcast %cst_191 : f32 to vector<8x512xf32>
    %461 = arith.select %459, %457, %460 : vector<8x512xi1>, vector<8x512xf32>
    %c14_i32 = arith.constant 14 : i32
    %462 = tpu.dynamic_rotate %446 by %c14_i32 dim 1 : vector<8x512xf32>, i32 -> vector<8x512xf32>
    %cst_192 = arith.constant 0.000000e+00 : f32
    %463 = vector.shape_cast %77 : vector<1x512xi1> to vector<1x512xi1>
    %464 = vector.broadcast %463 : vector<1x512xi1> to vector<8x512xi1>
    %465 = vector.broadcast %cst_192 : f32 to vector<8x512xf32>
    %466 = arith.select %464, %462, %465 : vector<8x512xi1>, vector<8x512xf32>
    %c1_i32_193 = arith.constant 1 : i32
    %467 = tpu.dynamic_rotate %446 by %c1_i32_193 dim 1 : vector<8x512xf32>, i32 -> vector<8x512xf32>
    %cst_194 = arith.constant 0.000000e+00 : f32
    %468 = vector.shape_cast %96 : vector<1x512xi1> to vector<1x512xi1>
    %469 = vector.broadcast %468 : vector<1x512xi1> to vector<8x512xi1>
    %470 = vector.broadcast %cst_194 : f32 to vector<8x512xf32>
    %471 = arith.select %469, %467, %470 : vector<8x512xi1>, vector<8x512xf32>
    %c511_i32_195 = arith.constant 511 : i32
    %472 = tpu.dynamic_rotate %446 by %c511_i32_195 dim 1 : vector<8x512xf32>, i32 -> vector<8x512xf32>
    %cst_196 = arith.constant 0.000000e+00 : f32
    %473 = vector.shape_cast %115 : vector<1x512xi1> to vector<1x512xi1>
    %474 = vector.broadcast %473 : vector<1x512xi1> to vector<8x512xi1>
    %475 = vector.broadcast %cst_196 : f32 to vector<8x512xf32>
    %476 = arith.select %474, %472, %475 : vector<8x512xi1>, vector<8x512xf32>
    %c510_i32 = arith.constant 510 : i32
    %477 = tpu.dynamic_rotate %446 by %c510_i32 dim 1 : vector<8x512xf32>, i32 -> vector<8x512xf32>
    %cst_197 = arith.constant 0.000000e+00 : f32
    %478 = vector.shape_cast %134 : vector<1x512xi1> to vector<1x512xi1>
    %479 = vector.broadcast %478 : vector<1x512xi1> to vector<8x512xi1>
    %480 = vector.broadcast %cst_197 : f32 to vector<8x512xf32>
    %481 = arith.select %479, %477, %480 : vector<8x512xi1>, vector<8x512xf32>
    %c497_i32_198 = arith.constant 497 : i32
    %482 = tpu.dynamic_rotate %446 by %c497_i32_198 dim 1 : vector<8x512xf32>, i32 -> vector<8x512xf32>
    %cst_199 = arith.constant 0.000000e+00 : f32
    %483 = vector.shape_cast %153 : vector<1x512xi1> to vector<1x512xi1>
    %484 = vector.broadcast %483 : vector<1x512xi1> to vector<8x512xi1>
    %485 = vector.broadcast %cst_199 : f32 to vector<8x512xf32>
    %486 = arith.select %484, %482, %485 : vector<8x512xi1>, vector<8x512xf32>
    %c496_i32_200 = arith.constant 496 : i32
    %487 = tpu.dynamic_rotate %446 by %c496_i32_200 dim 1 : vector<8x512xf32>, i32 -> vector<8x512xf32>
    %cst_201 = arith.constant 0.000000e+00 : f32
    %488 = vector.shape_cast %172 : vector<1x512xi1> to vector<1x512xi1>
    %489 = vector.broadcast %488 : vector<1x512xi1> to vector<8x512xi1>
    %490 = vector.broadcast %cst_201 : f32 to vector<8x512xf32>
    %491 = arith.select %489, %487, %490 : vector<8x512xi1>, vector<8x512xf32>
    %c495_i32_202 = arith.constant 495 : i32
    %492 = tpu.dynamic_rotate %446 by %c495_i32_202 dim 1 : vector<8x512xf32>, i32 -> vector<8x512xf32>
    %cst_203 = arith.constant 0.000000e+00 : f32
    %493 = vector.shape_cast %191 : vector<1x512xi1> to vector<1x512xi1>
    %494 = vector.broadcast %493 : vector<1x512xi1> to vector<8x512xi1>
    %495 = vector.broadcast %cst_203 : f32 to vector<8x512xf32>
    %496 = arith.select %494, %492, %495 : vector<8x512xi1>, vector<8x512xf32>
    %c494_i32 = arith.constant 494 : i32
    %497 = tpu.dynamic_rotate %446 by %c494_i32 dim 1 : vector<8x512xf32>, i32 -> vector<8x512xf32>
    %cst_204 = arith.constant 0.000000e+00 : f32
    %498 = vector.shape_cast %210 : vector<1x512xi1> to vector<1x512xi1>
    %499 = vector.broadcast %498 : vector<1x512xi1> to vector<8x512xi1>
    %500 = vector.broadcast %cst_204 : f32 to vector<8x512xf32>
    %501 = arith.select %499, %497, %500 : vector<8x512xi1>, vector<8x512xf32>
    %c481_i32 = arith.constant 481 : i32
    %502 = tpu.dynamic_rotate %446 by %c481_i32 dim 1 : vector<8x512xf32>, i32 -> vector<8x512xf32>
    %cst_205 = arith.constant 0.000000e+00 : f32
    %503 = vector.shape_cast %229 : vector<1x512xi1> to vector<1x512xi1>
    %504 = vector.broadcast %503 : vector<1x512xi1> to vector<8x512xi1>
    %505 = vector.broadcast %cst_205 : f32 to vector<8x512xf32>
    %506 = arith.select %504, %502, %505 : vector<8x512xi1>, vector<8x512xf32>
    %c480_i32 = arith.constant 480 : i32
    %507 = tpu.dynamic_rotate %446 by %c480_i32 dim 1 : vector<8x512xf32>, i32 -> vector<8x512xf32>
    %cst_206 = arith.constant 0.000000e+00 : f32
    %508 = vector.shape_cast %248 : vector<1x512xi1> to vector<1x512xi1>
    %509 = vector.broadcast %508 : vector<1x512xi1> to vector<8x512xi1>
    %510 = vector.broadcast %cst_206 : f32 to vector<8x512xf32>
    %511 = arith.select %509, %507, %510 : vector<8x512xi1>, vector<8x512xf32>
    %c479_i32 = arith.constant 479 : i32
    %512 = tpu.dynamic_rotate %446 by %c479_i32 dim 1 : vector<8x512xf32>, i32 -> vector<8x512xf32>
    %cst_207 = arith.constant 0.000000e+00 : f32
    %513 = vector.shape_cast %267 : vector<1x512xi1> to vector<1x512xi1>
    %514 = vector.broadcast %513 : vector<1x512xi1> to vector<8x512xi1>
    %515 = vector.broadcast %cst_207 : f32 to vector<8x512xf32>
    %516 = arith.select %514, %512, %515 : vector<8x512xi1>, vector<8x512xf32>
    %c478_i32 = arith.constant 478 : i32
    %517 = tpu.dynamic_rotate %446 by %c478_i32 dim 1 : vector<8x512xf32>, i32 -> vector<8x512xf32>
    %cst_208 = arith.constant 0.000000e+00 : f32
    %518 = vector.shape_cast %286 : vector<1x512xi1> to vector<1x512xi1>
    %519 = vector.broadcast %518 : vector<1x512xi1> to vector<8x512xi1>
    %520 = vector.broadcast %cst_208 : f32 to vector<8x512xf32>
    %521 = arith.select %519, %517, %520 : vector<8x512xi1>, vector<8x512xf32>
    %522 = tpu.concatenate %451, %456, %461, %466, %471, %446, %476, %481, %486, %491, %496, %501, %506, %511, %516, %521 in 0 : vector<8x512xf32>, vector<8x512xf32>, vector<8x512xf32>, vector<8x512xf32>, vector<8x512xf32>, vector<8x512xf32>, vector<8x512xf32>, vector<8x512xf32>, vector<8x512xf32>, vector<8x512xf32>, vector<8x512xf32>, vector<8x512xf32>, vector<8x512xf32>, vector<8x512xf32>, vector<8x512xf32>, vector<8x512xf32> -> vector<128x512xf32>
    %c0_209 = arith.constant 0 : index
    %c0_210 = arith.constant 0 : index
    %523 = vector.load %arg15[%c0_209, %c0_210] : memref<8x128xf32, #tpu.memory_space<vmem>>, vector<8x128xf32>
    %cst_211 = arith.constant dense<0.000000e+00> : vector<8x512xf32>
    %524 = tpu.matmul %523, %522, %cst_211 {dimension_numbers = #tpu.dot_dimension_numbers<[1], [0], [0], [1], [0, 0, 1, 1], [], []>} : vector<8x128xf32>, vector<128x512xf32>, vector<8x512xf32> -> vector<8x512xf32>
    %c0_212 = arith.constant 0 : index
    %c0_213 = arith.constant 0 : index
    %525 = vector.load %arg16[%c0_212, %c0_213] : memref<8x1xf32, #tpu.memory_space<vmem>>, vector<8x1xf32>
    %526 = vector.broadcast %525 : vector<8x1xf32> to vector<8x512xf32>
    %527 = arith.addf %524, %526 : vector<8x512xf32>
    %c0_214 = arith.constant 0 : index
    %c0_215 = arith.constant 0 : index
    %528 = vector.load %arg17[%c0_214, %c0_215] : memref<8x512xf32, #tpu.memory_space<vmem>>, vector<8x512xf32>
    tpu.vector_store %arg17[%c0_214, %c0_215], %527 {strides = array<i32>} : memref<8x512xf32, #tpu.memory_space<vmem>>, vector<8x512xf32>,
    return
  }
}

</mosaic_0001>

<llo_original>
// kernel: block_forward.1
$region0: #{block_forward.1}
  #allocation0 [shape = 'u32[]', space=smem, size = 0x4, offset = 0x4, fixed_abs, tag = 'smem constant byte address 0x4 - core index']
  #allocation1 [shape = 'u32[144,128]{1,0:T(1,128)}', space=vmem, size = 0x12000, scoped, tag = 'internal scratch']
  %s0 = inlined_call_operand.vmem [shape: f32[8,512], index: 0, kind: input, shape index: {}]
  %s1 = inlined_call_operand.vmem [shape: f32[32,2], index: 1, kind: input, shape index: {}]
  %s2 = inlined_call_operand.vmem [shape: f32[2,512], index: 2, kind: input, shape index: {}]
  %s3 = inlined_call_operand.vmem [shape: s32[1,512], index: 3, kind: input, shape index: {}]
  %s4 = inlined_call_operand.vmem [shape: s32[1,512], index: 4, kind: input, shape index: {}]
  %s5 = inlined_call_operand.vmem [shape: f32[8,32], index: 5, kind: input, shape index: {}]
  %s6 = inlined_call_operand.vmem [shape: f32[8,1], index: 6, kind: input, shape index: {}]
  %s7 = inlined_call_operand.vmem [shape: f32[8,72], index: 7, kind: input, shape index: {}]
  %s8 = inlined_call_operand.vmem [shape: f32[8,1], index: 8, kind: input, shape index: {}]
  %s9 = inlined_call_operand.vmem [shape: f32[8,1], index: 9, kind: input, shape index: {}]
  %s10 = inlined_call_operand.vmem [shape: f32[8,1], index: 10, kind: input, shape index: {}]
  %s11 = inlined_call_operand.vmem [shape: f32[8,72], index: 11, kind: input, shape index: {}]
  %s12 = inlined_call_operand.vmem [shape: f32[8,1], index: 12, kind: input, shape index: {}]
  %s13 = inlined_call_operand.vmem [shape: f32[8,1], index: 13, kind: input, shape index: {}]
  %s14 = inlined_call_operand.vmem [shape: f32[8,1], index: 14, kind: input, shape index: {}]
  %s15 = inlined_call_operand.vmem [shape: f32[8,128], index: 15, kind: input, shape index: {}]
  %s16 = inlined_call_operand.vmem [shape: f32[8,1], index: 16, kind: input, shape index: {}]
  %s17 = inlined_call_operand.vmem [shape: f32[8,512], index: 17, kind: output, shape index: {}]
  %s18 = sld [smem:[#allocation0]]
  $region78: #{block_forward.1} parent=0
    _
  %s20 = ssub.s32 1, %s18
  %s21 = scalar_select 0, %s20, %s18
  // Predicated region
  $region2: #{block_forward.1} parent=0 // pred_check
    _
  $region3: #{block_forward.1} parent=0 // pred_check_branch
    %23 = sbr.rel (0) target = $region5
  $region4: #{block_forward.1} parent=0 // pred_region
    _
  $region5: #{block_forward.1} parent=0 // pred_fallthru
    _
  // Predicated region
  $region6: #{block_forward.1} parent=0 // pred_check
    _
  $region7: #{block_forward.1} parent=0 // pred_check_branch
    %25 = sbr.rel (0) target = $region9
  $region8: #{block_forward.1} parent=0 // pred_region
    _
  $region9: #{block_forward.1} parent=0 // pred_fallthru
    _
  // Predicated region
  $region10: #{block_forward.1} parent=0 // pred_check
    _
  $region11: #{block_forward.1} parent=0 // pred_check_branch
    %27 = sbr.rel (0) target = $region13
  $region12: #{block_forward.1} parent=0 // pred_region
    _
  $region13: #{block_forward.1} parent=0 // pred_fallthru
    _
  // Predicated region
  $region14: #{block_forward.1} parent=0 // pred_check
    _
  $region15: #{block_forward.1} parent=0 // pred_check_branch
    %29 = sbr.rel (0) target = $region17
  $region16: #{block_forward.1} parent=0 // pred_region
    _
  $region17: #{block_forward.1} parent=0 // pred_fallthru
    _
  // Predicated region
  $region18: #{block_forward.1} parent=0 // pred_check
    _
  $region19: #{block_forward.1} parent=0 // pred_check_branch
    %31 = sbr.rel (0) target = $region21
  $region20: #{block_forward.1} parent=0 // pred_region
    _
  $region21: #{block_forward.1} parent=0 // pred_fallthru
    _
  // Predicated region
  $region22: #{block_forward.1} parent=0 // pred_check
    _
  $region23: #{block_forward.1} parent=0 // pred_check_branch
    %33 = sbr.rel (0) target = $region25
  $region24: #{block_forward.1} parent=0 // pred_region
    _
  $region25: #{block_forward.1} parent=0 // pred_fallthru
    _
  // Predicated region
  $region26: #{block_forward.1} parent=0 // pred_check
    _
  $region27: #{block_forward.1} parent=0 // pred_check_branch
    %35 = sbr.rel (0) target = $region29
  $region28: #{block_forward.1} parent=0 // pred_region
    _
  $region29: #{block_forward.1} parent=0 // pred_fallthru
    _
  // Predicated region
  $region30: #{block_forward.1} parent=0 // pred_check
    _
  $region31: #{block_forward.1} parent=0 // pred_check_branch
    %37 = sbr.rel (0) target = $region33
  $region32: #{block_forward.1} parent=0 // pred_region
    _
  $region33: #{block_forward.1} parent=0 // pred_fallthru
    _
  // Predicated region
  $region34: #{block_forward.1} parent=0 // pred_check
    _
  $region35: #{block_forward.1} parent=0 // pred_check_branch
    %39 = sbr.rel (0) target = $region37
  $region36: #{block_forward.1} parent=0 // pred_region
    _
  $region37: #{block_forward.1} parent=0 // pred_fallthru
    _
  // Predicated region
  $region38: #{block_forward.1} parent=0 // pred_check
    _
  $region39: #{block_forward.1} parent=0 // pred_check_branch
    %41 = sbr.rel (0) target = $region41
  $region40: #{block_forward.1} parent=0 // pred_region
    _
  $region41: #{block_forward.1} parent=0 // pred_fallthru
    _
  // Predicated region
  $region42: #{block_forward.1} parent=0 // pred_check
    _
  $region43: #{block_forward.1} parent=0 // pred_check_branch
    %43 = sbr.rel (0) target = $region45
  $region44: #{block_forward.1} parent=0 // pred_region
    _
  $region45: #{block_forward.1} parent=0 // pred_fallthru
    _
  // Predicated region
  $region46: #{block_forward.1} parent=0 // pred_check
    _
  $region47: #{block_forward.1} parent=0 // pred_check_branch
    %45 = sbr.rel (0) target = $region49
  $region48: #{block_forward.1} parent=0 // pred_region
    _
  $region49: #{block_forward.1} parent=0 // pred_fallthru
    _
  // Predicated region
  $region50: #{block_forward.1} parent=0 // pred_check
    _
  $region51: #{block_forward.1} parent=0 // pred_check_branch
    %47 = sbr.rel (0) target = $region53
  $region52: #{block_forward.1} parent=0 // pred_region
    _
  $region53: #{block_forward.1} parent=0 // pred_fallthru
    _
  // Predicated region
  $region54: #{block_forward.1} parent=0 // pred_check
    _
  $region55: #{block_forward.1} parent=0 // pred_check_branch
    %49 = sbr.rel (0) target = $region57
  $region56: #{block_forward.1} parent=0 // pred_region
    _
  $region57: #{block_forward.1} parent=0 // pred_fallthru
    _
  // Predicated region
  $region58: #{block_forward.1} parent=0 // pred_check
    _
  $region59: #{block_forward.1} parent=0 // pred_check_branch
    %51 = sbr.rel (0) target = $region61
  $region60: #{block_forward.1} parent=0 // pred_region
    _
  $region61: #{block_forward.1} parent=0 // pred_fallthru
    _
  // Predicated region
  $region62: #{block_forward.1} parent=0 // pred_check
    _
  $region63: #{block_forward.1} parent=0 // pred_check_branch
    %53 = sbr.rel (0) target = $region65
  $region64: #{block_forward.1} parent=0 // pred_region
    _
  $region65: #{block_forward.1} parent=0 // pred_fallthru
    _
  // Predicated region
  $region66: #{block_forward.1} parent=0 // pred_check
    _
  $region67: #{block_forward.1} parent=0 // pred_check_branch
    %55 = sbr.rel (0) target = $region69
  $region68: #{block_forward.1} parent=0 // pred_region
    _
  $region69: #{block_forward.1} parent=0 // pred_fallthru
    _
  %v56 = vld [vmem:[%s3] sm:$0xf]
  %v57 = vld [vmem:[%s4] sm:$0xf]
  %v58 = vadd.s32 %v56, 4294967295
  %vm59 = vcmp.ge.s32.totalorder %v58, 0
  %vm60 = vcmp.lt.s32.totalorder %v58, 16
  %vm61 = vmand %vm59, %vm60
  %v62 = vadd.s32 %v57, 4294967295
  %vm63 = vcmp.ge.s32.totalorder %v62, 0
  %vm64 = vmand %vm61, %vm63
  %vm65 = vcmp.lt.s32.totalorder %v62, 16
  %vm66 = vmand %vm64, %vm65
  %vm67 = vcmp.ge.s32.totalorder %v57, 0
  %vm68 = vmand %vm61, %vm67
  %vm69 = vcmp.lt.s32.totalorder %v57, 16
  %vm70 = vmand %vm68, %vm69
  %v71 = vadd.s32 %v57, 1
  %vm72 = vcmp.ge.s32.totalorder %v71, 0
  %vm73 = vmand %vm61, %vm72
  %vm74 = vcmp.lt.s32.totalorder %v71, 16
  %vm75 = vmand %vm73, %vm74
  %v76 = vadd.s32 %v57, 2
  %vm77 = vcmp.ge.s32.totalorder %v76, 0
  %vm78 = vmand %vm61, %vm77
  %vm79 = vcmp.lt.s32.totalorder %v76, 16
  %vm80 = vmand %vm78, %vm79
  %vm81 = vcmp.ge.s32.totalorder %v56, 0
  %vm82 = vcmp.lt.s32.totalorder %v56, 16
  %vm83 = vmand %vm81, %vm82
  %vm84 = vmand %vm83, %vm63
  %vm85 = vmand %vm84, %vm65
  %vm86 = vmand %vm83, %vm72
  %vm87 = vmand %vm86, %vm74
  %vm88 = vmand %vm83, %vm77
  %vm89 = vmand %vm88, %vm79
  %v90 = vadd.s32 %v56, 1
  %vm91 = vcmp.ge.s32.totalorder %v90, 0
  %vm92 = vcmp.lt.s32.totalorder %v90, 16
  %vm93 = vmand %vm91, %vm92
  %vm94 = vmand %vm93, %vm63
  %vm95 = vmand %vm94, %vm65
  %vm96 = vmand %vm93, %vm67
  %vm97 = vmand %vm96, %vm69
  %vm98 = vmand %vm93, %vm72
  %vm99 = vmand %vm98, %vm74
  %vm100 = vmand %vm93, %vm77
  %vm101 = vmand %vm100, %vm79
  %v102 = vadd.s32 %v56, 2
  %vm103 = vcmp.ge.s32.totalorder %v102, 0
  %vm104 = vcmp.lt.s32.totalorder %v102, 16
  %vm105 = vmand %vm103, %vm104
  %vm106 = vmand %vm105, %vm63
  %vm107 = vmand %vm106, %vm65
  %vm108 = vmand %vm105, %vm67
  %vm109 = vmand %vm108, %vm69
  %vm110 = vmand %vm105, %vm72
  %vm111 = vmand %vm110, %vm74
  %vm112 = vmand %vm105, %vm77
  %vm113 = vmand %vm112, %vm79
  %v114 = vld [vmem:[%s5] sm:$0xff]
  %v115 = vld [vmem:[%s1] sm:$0xff]
  %v116 = vld [vmem:[%s1 + $0x8] sm:$0xff]
  %v117 = vld [vmem:[%s1 + $0x10] sm:$0xff]
  %v118 = vld [vmem:[%s1 + $0x18] sm:$0xff]
  %v119 = vld [vmem:[%s6] sm:$0xff]
  %121 = vset.pattern.permute.xlu0 0
  %122 = vperm.xlu0 %121, %v119
  %v123 = vpop.permute.xlu0 %122
  %vm125 = vcmask 261120
  %v127 = vsel %vm125, %v114, 0
  %129 = vmatprep.subr.mxu0 0.0
  %130 = vmatpush1.msra.mxu0 %v115
  %131 = vmatprep.subr.mxu0 0.0
  %132 = vmatpush1.msra.mxu0 %v116
  %133 = vmatprep.subr.mxu0 0.0
  %134 = vmatpush1.msra.mxu0 %v117
  %135 = vmatprep.subr.mxu0 0.0
  %136 = vmatpush1.msra.mxu0 %v118
  %137 = vmatprep.subr.mxu0 0.0
  %138 = vmatpush1.msra.mxu0 0.0
  %139 = vmatprep.subr.mxu0 0.0
  %140 = vmatpush1.msra.mxu0 0.0
  %141 = vmatprep.subr.mxu0 0.0
  %142 = vmatpush1.msra.mxu0 0.0
  %143 = vmatprep.subr.mxu0 0.0
  %144 = vmatpush1.msra.mxu0 0.0
  %145 = vmatprep.subr.mxu0 0.0
  %146 = vmatpush1.msra.mxu0 0.0
  %147 = vmatprep.subr.mxu0 0.0
  %148 = vmatpush1.msra.mxu0 0.0
  %149 = vmatprep.subr.mxu0 0.0
  %150 = vmatpush1.msra.mxu0 0.0
  %151 = vmatprep.subr.mxu0 0.0
  %152 = vmatpush1.msra.mxu0 0.0
  %153 = vmatprep.subr.mxu0 0.0
  %154 = vmatpush1.msra.mxu0 0.0
  %155 = vmatprep.subr.mxu0 0.0
  %156 = vmatpush1.msra.mxu0 0.0
  %157 = vmatprep.subr.mxu0 0.0
  %158 = vmatpush1.msra.mxu0 0.0
  %159 = vmatprep.subr.mxu0 0.0
  %160 = vmatpush1.msra.mxu0 0.0
  %161 = vmatprep.subr.mxu0 0.0
  %162 = vmatpush1.msra.mxu0 0.0
  %163 = vmatprep.subr.mxu0 0.0
  %164 = vmatpush1.msra.mxu0 0.0
  %165 = vmatprep.subr.mxu0 0.0
  %166 = vmatpush1.msra.mxu0 0.0
  %167 = vmatprep.subr.mxu0 0.0
  %168 = vmatpush1.msra.mxu0 0.0
  %169 = vmatprep.subr.mxu0 0.0
  %170 = vmatpush1.msra.mxu0 0.0
  %171 = vmatprep.subr.mxu0 0.0
  %172 = vmatpush1.msra.mxu0 0.0
  %173 = vmatprep.subr.mxu0 0.0
  %174 = vmatpush1.msra.mxu0 0.0
  %175 = vmatprep.subr.mxu0 0.0
  %176 = vmatpush1.msra.mxu0 0.0
  %177 = vmatprep.subr.mxu0 0.0
  %178 = vmatpush1.msra.mxu0 0.0
  %179 = vmatprep.subr.mxu0 0.0
  %180 = vmatpush1.msra.mxu0 0.0
  %181 = vmatprep.subr.mxu0 0.0
  %182 = vmatpush1.msra.mxu0 0.0
  %183 = vmatprep.subr.mxu0 0.0
  %184 = vmatpush1.msra.mxu0 0.0
  %185 = vmatprep.subr.mxu0 0.0
  %186 = vmatpush1.msra.mxu0 0.0
  %187 = vmatprep.subr.mxu0 0.0
  %188 = vmatpush1.msra.mxu0 0.0
  %189 = vmatprep.subr.mxu0 0.0
  %190 = vmatpush1.msra.mxu0 0.0
  %191 = vmatprep.subr.mxu0 0.0
  %192 = vmatpush1.msra.mxu0 0.0
  %193 = vmatprep.mubr.f32.mxu0 0.0
  %194 = vmatmul.mubr.f32.gmra.mrb[0].mxu0 %v127
  %v195 = vpop.f32.mrb[0].mxu0
  %v196 = vadd.f32 %v123, %v195
  %v197 = vpop.f32.mrb[0].mxu0
  %198 = vdwg.mxu0
  %v199 = vmax.f32 %v196, 0.0
  %v200 = vld [vmem:[%s2] sm:$0xff]
  %v202 = vcombine.high %v200, %v200
  %v204 = vunpack.c.l.s4 1983009808
  %v205 = vunpack.c.0.s8 %v204
  %v206 = vlaneseq
  %v207 = vshrl.u32 %v206, 7
  %v208 = vsub.s32 %v205, %v207
  %v209 = vrot.slane %v200, %v208
  %v211 = vunpack.c.l.s4 1983009808
  %v212 = vunpack.c.0.s8 %v211
  %v213 = vlaneseq
  %v214 = vshrl.u32 %v213, 7
  %v215 = vsub.s32 %v212, %v214
  %v216 = vrot.slane %v202, %v215
  %v217 = vcombine.high %v209, %v209
  %v218 = vcombine.high %v216, %v216
  %vm219 = vcmask 15360
  %v221 = vsel %vm219, %v199, 0
  %vm223 = vcmask 1041408
  %v224 = vsel %vm223, %v209, 0
  %v226 = vsel %vm223, %v217, 0
  %v228 = vsel %vm223, %v216, 0
  %v230 = vsel %vm223, %v218, 0
  %232 = vmatprep.subr.mxu0 %v226
  %233 = vmatpush1.msra.mxu0 %v224
  %234 = vmatprep.subr.mxu0 0.0
  %235 = vmatpush1.msra.mxu0 0.0
  %236 = vmatprep.subr.mxu0 0.0
  %237 = vmatpush1.msra.mxu0 0.0
  %238 = vmatprep.subr.mxu0 0.0
  %239 = vmatpush1.msra.mxu0 0.0
  %240 = vmatprep.subr.mxu0 0.0
  %241 = vmatpush1.msra.mxu0 0.0
  %242 = vmatprep.subr.mxu0 0.0
  %243 = vmatpush1.msra.mxu0 0.0
  %244 = vmatprep.subr.mxu0 0.0
  %245 = vmatpush1.msra.mxu0 0.0
  %246 = vmatprep.subr.mxu0 0.0
  %247 = vmatpush1.msra.mxu0 0.0
  %248 = vmatprep.subr.mxu0 0.0
  %249 = vmatpush1.msra.mxu0 0.0
  %250 = vmatprep.subr.mxu0 0.0
  %251 = vmatpush1.msra.mxu0 0.0
  %252 = vmatprep.subr.mxu0 0.0
  %253 = vmatpush1.msra.mxu0 0.0
  %254 = vmatprep.subr.mxu0 0.0
  %255 = vmatpush1.msra.mxu0 0.0
  %256 = vmatprep.subr.mxu0 0.0
  %257 = vmatpush1.msra.mxu0 0.0
  %258 = vmatprep.subr.mxu0 0.0
  %259 = vmatpush1.msra.mxu0 0.0
  %260 = vmatprep.subr.mxu0 0.0
  %261 = vmatpush1.msra.mxu0 0.0
  %262 = vmatprep.subr.mxu0 0.0
  %263 = vmatpush1.msra.mxu0 0.0
  %264 = vmatprep.subr.mxu0 0.0
  %265 = vmatpush1.msra.mxu0 0.0
  %266 = vmatprep.subr.mxu0 0.0
  %267 = vmatpush1.msra.mxu0 0.0
  %268 = vmatprep.subr.mxu0 0.0
  %269 = vmatpush1.msra.mxu0 0.0
  %270 = vmatprep.subr.mxu0 0.0
  %271 = vmatpush1.msra.mxu0 0.0
  %272 = vmatprep.subr.mxu0 0.0
  %273 = vmatpush1.msra.mxu0 0.0
  %274 = vmatprep.subr.mxu0 0.0
  %275 = vmatpush1.msra.mxu0 0.0
  %276 = vmatprep.subr.mxu0 0.0
  %277 = vmatpush1.msra.mxu0 0.0
  %278 = vmatprep.subr.mxu0 0.0
  %279 = vmatpush1.msra.mxu0 0.0
  %280 = vmatprep.subr.mxu0 0.0
  %281 = vmatpush1.msra.mxu0 0.0
  %282 = vmatprep.subr.mxu0 0.0
  %283 = vmatpush1.msra.mxu0 0.0
  %284 = vmatprep.subr.mxu0 0.0
  %285 = vmatpush1.msra.mxu0 0.0
  %286 = vmatprep.subr.mxu0 0.0
  %287 = vmatpush1.msra.mxu0 0.0
  %288 = vmatprep.subr.mxu0 0.0
  %289 = vmatpush1.msra.mxu0 0.0
  %290 = vmatprep.subr.mxu0 0.0
  %291 = vmatpush1.msra.mxu0 0.0
  %292 = vmatprep.subr.mxu0 0.0
  %293 = vmatpush1.msra.mxu0 0.0
  %294 = vmatprep.subr.mxu0 0.0
  %295 = vmatpush1.msra.mxu0 0.0
  %296 = vmatprep.mubr.f32.mxu0 0.0
  %297 = vmatmul.mubr.f32.gmra.mrb[0].mxu0 %v221
  %v298 = vpop.f32.mrb[0].mxu0
  %v299 = vadd.f32 0.0, %v298
  %v300 = vpop.f32.mrb[0].mxu0
  %v301 = vadd.f32 0.0, %v300
  %302 = vdwg.mxu0
  %303 = vmatprep.subr.mxu0 %v230
  %304 = vmatpush1.msra.mxu0 %v228
  %305 = vmatprep.subr.mxu0 0.0
  %306 = vmatpush1.msra.mxu0 0.0
  %307 = vmatprep.subr.mxu0 0.0
  %308 = vmatpush1.msra.mxu0 0.0
  %309 = vmatprep.subr.mxu0 0.0
  %310 = vmatpush1.msra.mxu0 0.0
  %311 = vmatprep.subr.mxu0 0.0
  %312 = vmatpush1.msra.mxu0 0.0
  %313 = vmatprep.subr.mxu0 0.0
  %314 = vmatpush1.msra.mxu0 0.0
  %315 = vmatprep.subr.mxu0 0.0
  %316 = vmatpush1.msra.mxu0 0.0
  %317 = vmatprep.subr.mxu0 0.0
  %318 = vmatpush1.msra.mxu0 0.0
  %319 = vmatprep.subr.mxu0 0.0
  %320 = vmatpush1.msra.mxu0 0.0
  %321 = vmatprep.subr.mxu0 0.0
  %322 = vmatpush1.msra.mxu0 0.0
  %323 = vmatprep.subr.mxu0 0.0
  %324 = vmatpush1.msra.mxu0 0.0
  %325 = vmatprep.subr.mxu0 0.0
  %326 = vmatpush1.msra.mxu0 0.0
  %327 = vmatprep.subr.mxu0 0.0
  %328 = vmatpush1.msra.mxu0 0.0
  %329 = vmatprep.subr.mxu0 0.0
  %330 = vmatpush1.msra.mxu0 0.0
  %331 = vmatprep.subr.mxu0 0.0
  %332 = vmatpush1.msra.mxu0 0.0
  %333 = vmatprep.subr.mxu0 0.0
  %334 = vmatpush1.msra.mxu0 0.0
  %335 = vmatprep.subr.mxu0 0.0
  %336 = vmatpush1.msra.mxu0 0.0
  %337 = vmatprep.subr.mxu0 0.0
  %338 = vmatpush1.msra.mxu0 0.0
  %339 = vmatprep.subr.mxu0 0.0
  %340 = vmatpush1.msra.mxu0 0.0
  %341 = vmatprep.subr.mxu0 0.0
  %342 = vmatpush1.msra.mxu0 0.0
  %343 = vmatprep.subr.mxu0 0.0
  %344 = vmatpush1.msra.mxu0 0.0
  %345 = vmatprep.subr.mxu0 0.0
  %346 = vmatpush1.msra.mxu0 0.0
  %347 = vmatprep.subr.mxu0 0.0
  %348 = vmatpush1.msra.mxu0 0.0
  %349 = vmatprep.subr.mxu0 0.0
  %350 = vmatpush1.msra.mxu0 0.0
  %351 = vmatprep.subr.mxu0 0.0
  %352 = vmatpush1.msra.mxu0 0.0
  %353 = vmatprep.subr.mxu0 0.0
  %354 = vmatpush1.msra.mxu0 0.0
  %355 = vmatprep.subr.mxu0 0.0
  %356 = vmatpush1.msra.mxu0 0.0
  %357 = vmatprep.subr.mxu0 0.0
  %358 = vmatpush1.msra.mxu0 0.0
  %359 = vmatprep.subr.mxu0 0.0
  %360 = vmatpush1.msra.mxu0 0.0
  %361 = vmatprep.subr.mxu0 0.0
  %362 = vmatpush1.msra.mxu0 0.0
  %363 = vmatprep.subr.mxu0 0.0
  %364 = vmatpush1.msra.mxu0 0.0
  %365 = vmatprep.subr.mxu0 0.0
  %366 = vmatpush1.msra.mxu0 0.0
  %367 = vmatprep.mubr.f32.mxu0 0.0
  %368 = vmatmul.mubr.f32.gmra.mrb[0].mxu0 %v221
  %v369 = vpop.f32.mrb[0].mxu0
  %v370 = vadd.f32 0.0, %v369
  %v371 = vpop.f32.mrb[0].mxu0
  %v372 = vadd.f32 0.0, %v371
  %373 = vdwg.mxu0
  %v374 = vld [vmem:[%s0] sm:$0xff]
  %v375 = vld [vmem:[%s0 + $0x8] sm:$0xff]
  %v376 = vld [vmem:[%s0 + $0x10] sm:$0xff]
  %v377 = vld [vmem:[%s0 + $0x18] sm:$0xff]
  %378 = vrot.lane.b32.xlu0 %v374, 17
  %v379 = vpop.permute.xlu0 %378
  %380 = vrot.lane.b32.xlu0 %v375, 17
  %v381 = vpop.permute.xlu0 %380
  %382 = vrot.lane.b32.xlu0 %v376, 17
  %v383 = vpop.permute.xlu0 %382
  %384 = vrot.lane.b32.xlu0 %v377, 17
  %v385 = vpop.permute.xlu0 %384
  %v386 = vlaneseq
  %v387 = vand.u32 %v386, 127
  %vm388 = vcmp.lt.s32.totalorder %v387, 17
  %v389 = vsel %vm388, %v383, %v385
  %v390 = vsel %vm388, %v381, %v383
  %v391 = vsel %vm388, %v379, %v381
  %v392 = vsel %vm388, %v385, %v379
  %v393 = vsel %vm66, 1, 0
  %v394 = vlaneseq
  %v395 = vshrl.u32 %v394, 7
  %v396 = vsub.s32 0, %v395
  %v397 = vrot.slane %v393, %v396
  %v398 = vlaneseq
  %v399 = vshrl.u32 %v398, 7
  %v400 = vsub.s32 1, %v399
  %v401 = vrot.slane %v393, %v400
  %v402 = vlaneseq
  %v403 = vshrl.u32 %v402, 7
  %v404 = vsub.s32 2, %v403
  %v405 = vrot.slane %v393, %v404
  %v406 = vlaneseq
  %v407 = vshrl.u32 %v406, 7
  %v408 = vsub.s32 3, %v407
  %v409 = vrot.slane %v393, %v408
  %vm410 = vcmp.eq.s32.totalorder %v397, 1
  %vm411 = vcmp.eq.s32.totalorder %v401, 1
  %vm412 = vcmp.eq.s32.totalorder %v405, 1
  %vm413 = vcmp.eq.s32.totalorder %v409, 1
  %v414 = vsel %vm410, %v392, 0.0
  %v415 = vsel %vm411, %v391, 0.0
  %v416 = vsel %vm412, %v390, 0.0
  %v417 = vsel %vm413, %v389, 0.0
  %418 = vrot.lane.b32.xlu0 %v374, 16
  %v419 = vpop.permute.xlu0 %418
  %420 = vrot.lane.b32.xlu0 %v375, 16
  %v421 = vpop.permute.xlu0 %420
  %422 = vrot.lane.b32.xlu0 %v376, 16
  %v423 = vpop.permute.xlu0 %422
  %424 = vrot.lane.b32.xlu0 %v377, 16
  %v425 = vpop.permute.xlu0 %424
  %vm426 = vcmp.lt.s32.totalorder %v387, 16
  %v427 = vsel %vm426, %v423, %v425
  %v428 = vsel %vm426, %v421, %v423
  %v429 = vsel %vm426, %v419, %v421
  %v430 = vsel %vm426, %v425, %v419
  %v431 = vsel %vm70, 1, 0
  %v432 = vlaneseq
  %v433 = vshrl.u32 %v432, 7
  %v434 = vsub.s32 0, %v433
  %v435 = vrot.slane %v431, %v434
  %v436 = vlaneseq
  %v437 = vshrl.u32 %v436, 7
  %v438 = vsub.s32 1, %v437
  %v439 = vrot.slane %v431, %v438
  %v440 = vlaneseq
  %v441 = vshrl.u32 %v440, 7
  %v442 = vsub.s32 2, %v441
  %v443 = vrot.slane %v431, %v442
  %v444 = vlaneseq
  %v445 = vshrl.u32 %v444, 7
  %v446 = vsub.s32 3, %v445
  %v447 = vrot.slane %v431, %v446
  %vm448 = vcmp.eq.s32.totalorder %v435, 1
  %vm449 = vcmp.eq.s32.totalorder %v439, 1
  %vm450 = vcmp.eq.s32.totalorder %v443, 1
  %vm451 = vcmp.eq.s32.totalorder %v447, 1
  %v452 = vsel %vm448, %v430, 0.0
  %v453 = vsel %vm449, %v429, 0.0
  %v454 = vsel %vm450, %v428, 0.0
  %v455 = vsel %vm451, %v427, 0.0
  %456 = vrot.lane.b32.xlu0 %v374, 15
  %v457 = vpop.permute.xlu0 %456
  %458 = vrot.lane.b32.xlu0 %v375, 15
  %v459 = vpop.permute.xlu0 %458
  %460 = vrot.lane.b32.xlu0 %v376, 15
  %v461 = vpop.permute.xlu0 %460
  %462 = vrot.lane.b32.xlu0 %v377, 15
  %v463 = vpop.permute.xlu0 %462
  %vm464 = vcmp.lt.s32.totalorder %v387, 15
  %v465 = vsel %vm464, %v461, %v463
  %v466 = vsel %vm464, %v459, %v461
  %v467 = vsel %vm464, %v457, %v459
  %v468 = vsel %vm464, %v463, %v457
  %v469 = vsel %vm75, 1, 0
  %v470 = vlaneseq
  %v471 = vshrl.u32 %v470, 7
  %v472 = vsub.s32 0, %v471
  %v473 = vrot.slane %v469, %v472
  %v474 = vlaneseq
  %v475 = vshrl.u32 %v474, 7
  %v476 = vsub.s32 1, %v475
  %v477 = vrot.slane %v469, %v476
  %v478 = vlaneseq
  %v479 = vshrl.u32 %v478, 7
  %v480 = vsub.s32 2, %v479
  %v481 = vrot.slane %v469, %v480
  %v482 = vlaneseq
  %v483 = vshrl.u32 %v482, 7
  %v484 = vsub.s32 3, %v483
  %v485 = vrot.slane %v469, %v484
  %vm486 = vcmp.eq.s32.totalorder %v473, 1
  %vm487 = vcmp.eq.s32.totalorder %v477, 1
  %vm488 = vcmp.eq.s32.totalorder %v481, 1
  %vm489 = vcmp.eq.s32.totalorder %v485, 1
  %v490 = vsel %vm486, %v468, 0.0
  %v491 = vsel %vm487, %v467, 0.0
  %v492 = vsel %vm488, %v466, 0.0
  %v493 = vsel %vm489, %v465, 0.0
  %494 = vrot.lane.b32.xlu0 %v374, 1
  %v495 = vpop.permute.xlu0 %494
  %496 = vrot.lane.b32.xlu0 %v375, 1
  %v497 = vpop.permute.xlu0 %496
  %498 = vrot.lane.b32.xlu0 %v376, 1
  %v499 = vpop.permute.xlu0 %498
  %500 = vrot.lane.b32.xlu0 %v377, 1
  %v501 = vpop.permute.xlu0 %500
  %vm502 = vcmp.lt.s32.totalorder %v387, 1
  %v503 = vsel %vm502, %v499, %v501
  %v504 = vsel %vm502, %v497, %v499
  %v505 = vsel %vm502, %v495, %v497
  %v506 = vsel %vm502, %v501, %v495
  %v507 = vsel %vm85, 1, 0
  %v508 = vlaneseq
  %v509 = vshrl.u32 %v508, 7
  %v510 = vsub.s32 0, %v509
  %v511 = vrot.slane %v507, %v510
  %v512 = vlaneseq
  %v513 = vshrl.u32 %v512, 7
  %v514 = vsub.s32 1, %v513
  %v515 = vrot.slane %v507, %v514
  %v516 = vlaneseq
  %v517 = vshrl.u32 %v516, 7
  %v518 = vsub.s32 2, %v517
  %v519 = vrot.slane %v507, %v518
  %v520 = vlaneseq
  %v521 = vshrl.u32 %v520, 7
  %v522 = vsub.s32 3, %v521
  %v523 = vrot.slane %v507, %v522
  %vm524 = vcmp.eq.s32.totalorder %v511, 1
  %vm525 = vcmp.eq.s32.totalorder %v515, 1
  %vm526 = vcmp.eq.s32.totalorder %v519, 1
  %vm527 = vcmp.eq.s32.totalorder %v523, 1
  %v528 = vsel %vm524, %v506, 0.0
  %v529 = vsel %vm525, %v505, 0.0
  %v530 = vsel %vm526, %v504, 0.0
  %v531 = vsel %vm527, %v503, 0.0
  %532 = vrot.lane.b32.xlu0 %v374, 127
  %v533 = vpop.permute.xlu0 %532
  %534 = vrot.lane.b32.xlu0 %v375, 127
  %v535 = vpop.permute.xlu0 %534
  %536 = vrot.lane.b32.xlu0 %v376, 127
  %v537 = vpop.permute.xlu0 %536
  %538 = vrot.lane.b32.xlu0 %v377, 127
  %v539 = vpop.permute.xlu0 %538
  %vm540 = vcmp.lt.s32.totalorder %v387, 127
  %v541 = vsel %vm540, %v537, %v539
  %v542 = vsel %vm540, %v535, %v537
  %v543 = vsel %vm540, %v533, %v535
  %v544 = vsel %vm540, %v539, %v533
  %v545 = vsel %vm87, 1, 0
  %v546 = vlaneseq
  %v547 = vshrl.u32 %v546, 7
  %v548 = vsub.s32 0, %v547
  %v549 = vrot.slane %v545, %v548
  %v550 = vlaneseq
  %v551 = vshrl.u32 %v550, 7
  %v552 = vsub.s32 1, %v551
  %v553 = vrot.slane %v545, %v552
  %v554 = vlaneseq
  %v555 = vshrl.u32 %v554, 7
  %v556 = vsub.s32 2, %v555
  %v557 = vrot.slane %v545, %v556
  %v558 = vlaneseq
  %v559 = vshrl.u32 %v558, 7
  %v560 = vsub.s32 3, %v559
  %v561 = vrot.slane %v545, %v560
  %vm562 = vcmp.eq.s32.totalorder %v549, 1
  %vm563 = vcmp.eq.s32.totalorder %v553, 1
  %vm564 = vcmp.eq.s32.totalorder %v557, 1
  %vm565 = vcmp.eq.s32.totalorder %v561, 1
  %v566 = vsel %vm562, %v543, 0.0
  %v567 = vsel %vm563, %v542, 0.0
  %v568 = vsel %vm564, %v541, 0.0
  %v569 = vsel %vm565, %v544, 0.0
  %570 = vrot.lane.b32.xlu0 %v374, 113
  %v571 = vpop.permute.xlu0 %570
  %572 = vrot.lane.b32.xlu0 %v375, 113
  %v573 = vpop.permute.xlu0 %572
  %574 = vrot.lane.b32.xlu0 %v376, 113
  %v575 = vpop.permute.xlu0 %574
  %576 = vrot.lane.b32.xlu0 %v377, 113
  %v577 = vpop.permute.xlu0 %576
  %vm578 = vcmp.lt.s32.totalorder %v387, 113
  %v579 = vsel %vm578, %v575, %v577
  %v580 = vsel %vm578, %v573, %v575
  %v581 = vsel %vm578, %v571, %v573
  %v582 = vsel %vm578, %v577, %v571
  %v583 = vsel %vm95, 1, 0
  %v584 = vlaneseq
  %v585 = vshrl.u32 %v584, 7
  %v586 = vsub.s32 0, %v585
  %v587 = vrot.slane %v583, %v586
  %v588 = vlaneseq
  %v589 = vshrl.u32 %v588, 7
  %v590 = vsub.s32 1, %v589
  %v591 = vrot.slane %v583, %v590
  %v592 = vlaneseq
  %v593 = vshrl.u32 %v592, 7
  %v594 = vsub.s32 2, %v593
  %v595 = vrot.slane %v583, %v594
  %v596 = vlaneseq
  %v597 = vshrl.u32 %v596, 7
  %v598 = vsub.s32 3, %v597
  %v599 = vrot.slane %v583, %v598
  %vm600 = vcmp.eq.s32.totalorder %v587, 1
  %vm601 = vcmp.eq.s32.totalorder %v591, 1
  %vm602 = vcmp.eq.s32.totalorder %v595, 1
  %vm603 = vcmp.eq.s32.totalorder %v599, 1
  %v604 = vsel %vm600, %v581, 0.0
  %v605 = vsel %vm601, %v580, 0.0
  %v606 = vsel %vm602, %v579, 0.0
  %v607 = vsel %vm603, %v582, 0.0
  %608 = vrot.lane.b32.xlu0 %v374, 112
  %v609 = vpop.permute.xlu0 %608
  %610 = vrot.lane.b32.xlu0 %v375, 112
  %v611 = vpop.permute.xlu0 %610
  %612 = vrot.lane.b32.xlu0 %v376, 112
  %v613 = vpop.permute.xlu0 %612
  %614 = vrot.lane.b32.xlu0 %v377, 112
  %v615 = vpop.permute.xlu0 %614
  %vm616 = vcmp.lt.s32.totalorder %v387, 112
  %v617 = vsel %vm616, %v613, %v615
  %v618 = vsel %vm616, %v611, %v613
  %v619 = vsel %vm616, %v609, %v611
  %v620 = vsel %vm616, %v615, %v609
  %v621 = vsel %vm97, 1, 0
  %v622 = vlaneseq
  %v623 = vshrl.u32 %v622, 7
  %v624 = vsub.s32 0, %v623
  %v625 = vrot.slane %v621, %v624
  %v626 = vlaneseq
  %v627 = vshrl.u32 %v626, 7
  %v628 = vsub.s32 1, %v627
  %v629 = vrot.slane %v621, %v628
  %v630 = vlaneseq
  %v631 = vshrl.u32 %v630, 7
  %v632 = vsub.s32 2, %v631
  %v633 = vrot.slane %v621, %v632
  %v634 = vlaneseq
  %v635 = vshrl.u32 %v634, 7
  %v636 = vsub.s32 3, %v635
  %v637 = vrot.slane %v621, %v636
  %vm638 = vcmp.eq.s32.totalorder %v625, 1
  %vm639 = vcmp.eq.s32.totalorder %v629, 1
  %vm640 = vcmp.eq.s32.totalorder %v633, 1
  %vm641 = vcmp.eq.s32.totalorder %v637, 1
  %v642 = vsel %vm638, %v619, 0.0
  %v643 = vsel %vm639, %v618, 0.0
  %v644 = vsel %vm640, %v617, 0.0
  %v645 = vsel %vm641, %v620, 0.0
  %646 = vrot.lane.b32.xlu0 %v374, 111
  %v647 = vpop.permute.xlu0 %646
  %648 = vrot.lane.b32.xlu0 %v375, 111
  %v649 = vpop.permute.xlu0 %648
  %650 = vrot.lane.b32.xlu0 %v376, 111
  %v651 = vpop.permute.xlu0 %650
  %652 = vrot.lane.b32.xlu0 %v377, 111
  %v653 = vpop.permute.xlu0 %652
  %vm654 = vcmp.lt.s32.totalorder %v387, 111
  %v655 = vsel %vm654, %v651, %v653
  %v656 = vsel %vm654, %v649, %v651
  %v657 = vsel %vm654, %v647, %v649
  %v658 = vsel %vm654, %v653, %v647
  %v659 = vsel %vm99, 1, 0
  %v660 = vlaneseq
  %v661 = vshrl.u32 %v660, 7
  %v662 = vsub.s32 0, %v661
  %v663 = vrot.slane %v659, %v662
  %v664 = vlaneseq
  %v665 = vshrl.u32 %v664, 7
  %v666 = vsub.s32 1, %v665
  %v667 = vrot.slane %v659, %v666
  %v668 = vlaneseq
  %v669 = vshrl.u32 %v668, 7
  %v670 = vsub.s32 2, %v669
  %v671 = vrot.slane %v659, %v670
  %v672 = vlaneseq
  %v673 = vshrl.u32 %v672, 7
  %v674 = vsub.s32 3, %v673
  %v675 = vrot.slane %v659, %v674
  %vm676 = vcmp.eq.s32.totalorder %v663, 1
  %vm677 = vcmp.eq.s32.totalorder %v667, 1
  %vm678 = vcmp.eq.s32.totalorder %v671, 1
  %vm679 = vcmp.eq.s32.totalorder %v675, 1
  %v680 = vsel %vm676, %v657, 0.0
  %v681 = vsel %vm677, %v656, 0.0
  %v682 = vsel %vm678, %v655, 0.0
  %v683 = vsel %vm679, %v658, 0.0
  %v684 = vld [vmem:[%s7] sm:$0xff]
  %v685 = vld [vmem:[%s8] sm:$0xff]
  %687 = vset.pattern.permute.xlu0 0
  %688 = vperm.xlu0 %687, %v685
  %v689 = vpop.permute.xlu0 %688
  %vm691 = vcmask 588800
  %v693 = vsel %vm691, %v684, 0
  %695 = vmatprep.subr.mxu0 %v415
  %696 = vmatpush1.msra.mxu0 %v414
  %697 = vmatprep.subr.mxu0 %v453
  %698 = vmatpush1.msra.mxu0 %v452
  %699 = vmatprep.subr.mxu0 %v491
  %700 = vmatpush1.msra.mxu0 %v490
  %701 = vmatprep.subr.mxu0 %v529
  %702 = vmatpush1.msra.mxu0 %v528
  %703 = vmatprep.subr.mxu0 %v375
  %704 = vmatpush1.msra.mxu0 %v374
  %705 = vmatprep.subr.mxu0 %v567
  %706 = vmatpush1.msra.mxu0 %v566
  %707 = vmatprep.subr.mxu0 %v605
  %708 = vmatpush1.msra.mxu0 %v604
  %709 = vmatprep.subr.mxu0 %v643
  %710 = vmatpush1.msra.mxu0 %v642
  %711 = vmatprep.subr.mxu0 %v681
  %712 = vmatpush1.msra.mxu0 %v680
  %713 = vmatprep.subr.mxu0 0.0
  %714 = vmatpush1.msra.mxu0 0.0
  %715 = vmatprep.subr.mxu0 0.0
  %716 = vmatpush1.msra.mxu0 0.0
  %717 = vmatprep.subr.mxu0 0.0
  %718 = vmatpush1.msra.mxu0 0.0
  %719 = vmatprep.subr.mxu0 0.0
  %720 = vmatpush1.msra.mxu0 0.0
  %721 = vmatprep.subr.mxu0 0.0
  %722 = vmatpush1.msra.mxu0 0.0
  %723 = vmatprep.subr.mxu0 0.0
  %724 = vmatpush1.msra.mxu0 0.0
  %725 = vmatprep.subr.mxu0 0.0
  %726 = vmatpush1.msra.mxu0 0.0
  %727 = vmatprep.subr.mxu0 0.0
  %728 = vmatpush1.msra.mxu0 0.0
  %729 = vmatprep.subr.mxu0 0.0
  %730 = vmatpush1.msra.mxu0 0.0
  %731 = vmatprep.subr.mxu0 0.0
  %732 = vmatpush1.msra.mxu0 0.0
  %733 = vmatprep.subr.mxu0 0.0
  %734 = vmatpush1.msra.mxu0 0.0
  %735 = vmatprep.subr.mxu0 0.0
  %736 = vmatpush1.msra.mxu0 0.0
  %737 = vmatprep.subr.mxu0 0.0
  %738 = vmatpush1.msra.mxu0 0.0
  %739 = vmatprep.subr.mxu0 0.0
  %740 = vmatpush1.msra.mxu0 0.0
  %741 = vmatprep.subr.mxu0 0.0
  %742 = vmatpush1.msra.mxu0 0.0
  %743 = vmatprep.subr.mxu0 0.0
  %744 = vmatpush1.msra.mxu0 0.0
  %745 = vmatprep.subr.mxu0 0.0
  %746 = vmatpush1.msra.mxu0 0.0
  %747 = vmatprep.subr.mxu0 0.0
  %748 = vmatpush1.msra.mxu0 0.0
  %749 = vmatprep.subr.mxu0 0.0
  %750 = vmatpush1.msra.mxu0 0.0
  %751 = vmatprep.subr.mxu0 0.0
  %752 = vmatpush1.msra.mxu0 0.0
  %753 = vmatprep.subr.mxu0 0.0
  %754 = vmatpush1.msra.mxu0 0.0
  %755 = vmatprep.subr.mxu0 0.0
  %756 = vmatpush1.msra.mxu0 0.0
  %757 = vmatprep.subr.mxu0 0.0
  %758 = vmatpush1.msra.mxu0 0.0
  %759 = vmatprep.mubr.f32.mxu0 0.0
  %760 = vmatmul.mubr.f32.gmra.mrb[0].mxu0 %v693
  %v761 = vpop.f32.mrb[0].mxu0
  %v762 = vadd.f32 %v689, %v761
  %v763 = vpop.f32.mrb[0].mxu0
  %v764 = vadd.f32 %v689, %v763
  %765 = vdwg.mxu0
  %766 = vmatprep.subr.mxu0 %v417
  %767 = vmatpush1.msra.mxu0 %v416
  %768 = vmatprep.subr.mxu0 %v455
  %769 = vmatpush1.msra.mxu0 %v454
  %770 = vmatprep.subr.mxu0 %v493
  %771 = vmatpush1.msra.mxu0 %v492
  %772 = vmatprep.subr.mxu0 %v531
  %773 = vmatpush1.msra.mxu0 %v530
  %774 = vmatprep.subr.mxu0 %v377
  %775 = vmatpush1.msra.mxu0 %v376
  %776 = vmatprep.subr.mxu0 %v569
  %777 = vmatpush1.msra.mxu0 %v568
  %778 = vmatprep.subr.mxu0 %v607
  %779 = vmatpush1.msra.mxu0 %v606
  %780 = vmatprep.subr.mxu0 %v645
  %781 = vmatpush1.msra.mxu0 %v644
  %782 = vmatprep.subr.mxu0 %v683
  %783 = vmatpush1.msra.mxu0 %v682
  %784 = vmatprep.subr.mxu0 0.0
  %785 = vmatpush1.msra.mxu0 0.0
  %786 = vmatprep.subr.mxu0 0.0
  %787 = vmatpush1.msra.mxu0 0.0
  %788 = vmatprep.subr.mxu0 0.0
  %789 = vmatpush1.msra.mxu0 0.0
  %790 = vmatprep.subr.mxu0 0.0
  %791 = vmatpush1.msra.mxu0 0.0
  %792 = vmatprep.subr.mxu0 0.0
  %793 = vmatpush1.msra.mxu0 0.0
  %794 = vmatprep.subr.mxu0 0.0
  %795 = vmatpush1.msra.mxu0 0.0
  %796 = vmatprep.subr.mxu0 0.0
  %797 = vmatpush1.msra.mxu0 0.0
  %798 = vmatprep.subr.mxu0 0.0
  %799 = vmatpush1.msra.mxu0 0.0
  %800 = vmatprep.subr.mxu0 0.0
  %801 = vmatpush1.msra.mxu0 0.0
  %802 = vmatprep.subr.mxu0 0.0
  %803 = vmatpush1.msra.mxu0 0.0
  %804 = vmatprep.subr.mxu0 0.0
  %805 = vmatpush1.msra.mxu0 0.0
  %806 = vmatprep.subr.mxu0 0.0
  %807 = vmatpush1.msra.mxu0 0.0
  %808 = vmatprep.subr.mxu0 0.0
  %809 = vmatpush1.msra.mxu0 0.0
  %810 = vmatprep.subr.mxu0 0.0
  %811 = vmatpush1.msra.mxu0 0.0
  %812 = vmatprep.subr.mxu0 0.0
  %813 = vmatpush1.msra.mxu0 0.0
  %814 = vmatprep.subr.mxu0 0.0
  %815 = vmatpush1.msra.mxu0 0.0
  %816 = vmatprep.subr.mxu0 0.0
  %817 = vmatpush1.msra.mxu0 0.0
  %818 = vmatprep.subr.mxu0 0.0
  %819 = vmatpush1.msra.mxu0 0.0
  %820 = vmatprep.subr.mxu0 0.0
  %821 = vmatpush1.msra.mxu0 0.0
  %822 = vmatprep.subr.mxu0 0.0
  %823 = vmatpush1.msra.mxu0 0.0
  %824 = vmatprep.subr.mxu0 0.0
  %825 = vmatpush1.msra.mxu0 0.0
  %826 = vmatprep.subr.mxu0 0.0
  %827 = vmatpush1.msra.mxu0 0.0
  %828 = vmatprep.subr.mxu0 0.0
  %829 = vmatpush1.msra.mxu0 0.0
  %830 = vmatprep.mubr.f32.mxu0 0.0
  %831 = vmatmul.mubr.f32.gmra.mrb[0].mxu0 %v693
  %v832 = vpop.f32.mrb[0].mxu0
  %v833 = vadd.f32 %v689, %v832
  %v834 = vpop.f32.mrb[0].mxu0
  %v835 = vadd.f32 %v689, %v834
  %836 = vdwg.mxu0
  %v837 = vmax.f32 %v762, 0.0
  %v838 = vmax.f32 %v764, 0.0
  %v839 = vmax.f32 %v833, 0.0
  %v840 = vmax.f32 %v835, 0.0
  %v841 = vld [vmem:[%s9] sm:$0xff]
  %v842 = vld [vmem:[%s10] sm:$0xff]
  %v843 = vadd.f32 %v837, %v838
  %v844 = vadd.f32 %v843, %v839
  %v845 = vadd.f32 %v844, %v840
  %846 = vadd.xlane.f32.xlu0 %v845
  %v847 = vpop.xlane.xlu0 %846
  %v848 = vrcp.pop 512.0
  %v849 = vmul.f32 %v847, %v848
  %v850 = vsub.f32 %v837, %v849
  %v851 = vsub.f32 %v838, %v849
  %v852 = vsub.f32 %v839, %v849
  %v853 = vsub.f32 %v840, %v849
  %v854 = vmul.f32 %v850, %v850
  %v855 = vmul.f32 %v851, %v851
  %v856 = vmul.f32 %v852, %v852
  %v857 = vmul.f32 %v853, %v853
  %v858 = vadd.f32 %v854, %v855
  %v859 = vadd.f32 %v858, %v856
  %v860 = vadd.f32 %v859, %v857
  %861 = vadd.xlane.f32.xlu0 %v860
  %v862 = vpop.xlane.xlu0 %861
  %v863 = vmul.f32 %v862, %v848
  %v864 = vadd.f32 %v863, 1e-05
  %v865 = vrsqrt.pop %v864
  %v866 = vmul.f32 %v850, %v865
  %v867 = vmul.f32 %v851, %v865
  %v868 = vmul.f32 %v852, %v865
  %v869 = vmul.f32 %v853, %v865
  %871 = vset.pattern.permute.xlu0 0
  %872 = vperm.xlu0 %871, %v841
  %v873 = vpop.permute.xlu0 %872
  %v875 = vmul.f32 %v866, %v873
  %v876 = vmul.f32 %v867, %v873
  %v877 = vmul.f32 %v868, %v873
  %v878 = vmul.f32 %v869, %v873
  %880 = vset.pattern.permute.xlu0 0
  %881 = vperm.xlu0 %880, %v842
  %v882 = vpop.permute.xlu0 %881
  %v884 = vadd.f32 %v875, %v882
  %v885 = vadd.f32 %v876, %v882
  %v886 = vadd.f32 %v877, %v882
  %v887 = vadd.f32 %v878, %v882
  %v888 = vadd.f32 %v884, %v299
  %v889 = vadd.f32 %v885, %v301
  %v890 = vadd.f32 %v886, %v370
  %v891 = vadd.f32 %v887, %v372
  %892 = vrot.lane.b32.xlu0 %v888, 17
  %v893 = vpop.permute.xlu0 %892
  %894 = vrot.lane.b32.xlu0 %v889, 17
  %v895 = vpop.permute.xlu0 %894
  %896 = vrot.lane.b32.xlu0 %v890, 17
  %v897 = vpop.permute.xlu0 %896
  %898 = vrot.lane.b32.xlu0 %v891, 17
  %v899 = vpop.permute.xlu0 %898
  %v900 = vsel %vm388, %v897, %v899
  %v901 = vsel %vm388, %v895, %v897
  %v902 = vsel %vm388, %v893, %v895
  %v903 = vsel %vm388, %v899, %v893
  %v904 = vsel %vm410, %v903, 0.0
  %v905 = vsel %vm411, %v902, 0.0
  %v906 = vsel %vm412, %v901, 0.0
  %v907 = vsel %vm413, %v900, 0.0
  %908 = vrot.lane.b32.xlu0 %v888, 16
  %v909 = vpop.permute.xlu0 %908
  %910 = vrot.lane.b32.xlu0 %v889, 16
  %v911 = vpop.permute.xlu0 %910
  %912 = vrot.lane.b32.xlu0 %v890, 16
  %v913 = vpop.permute.xlu0 %912
  %914 = vrot.lane.b32.xlu0 %v891, 16
  %v915 = vpop.permute.xlu0 %914
  %v916 = vsel %vm426, %v913, %v915
  %v917 = vsel %vm426, %v911, %v913
  %v918 = vsel %vm426, %v909, %v911
  %v919 = vsel %vm426, %v915, %v909
  %v920 = vsel %vm448, %v919, 0.0
  %v921 = vsel %vm449, %v918, 0.0
  %v922 = vsel %vm450, %v917, 0.0
  %v923 = vsel %vm451, %v916, 0.0
  %924 = vrot.lane.b32.xlu0 %v888, 15
  %v925 = vpop.permute.xlu0 %924
  %926 = vrot.lane.b32.xlu0 %v889, 15
  %v927 = vpop.permute.xlu0 %926
  %928 = vrot.lane.b32.xlu0 %v890, 15
  %v929 = vpop.permute.xlu0 %928
  %930 = vrot.lane.b32.xlu0 %v891, 15
  %v931 = vpop.permute.xlu0 %930
  %v932 = vsel %vm464, %v929, %v931
  %v933 = vsel %vm464, %v927, %v929
  %v934 = vsel %vm464, %v925, %v927
  %v935 = vsel %vm464, %v931, %v925
  %v936 = vsel %vm486, %v935, 0.0
  %v937 = vsel %vm487, %v934, 0.0
  %v938 = vsel %vm488, %v933, 0.0
  %v939 = vsel %vm489, %v932, 0.0
  %940 = vrot.lane.b32.xlu0 %v888, 1
  %v941 = vpop.permute.xlu0 %940
  %942 = vrot.lane.b32.xlu0 %v889, 1
  %v943 = vpop.permute.xlu0 %942
  %944 = vrot.lane.b32.xlu0 %v890, 1
  %v945 = vpop.permute.xlu0 %944
  %946 = vrot.lane.b32.xlu0 %v891, 1
  %v947 = vpop.permute.xlu0 %946
  %v948 = vsel %vm502, %v945, %v947
  %v949 = vsel %vm502, %v943, %v945
  %v950 = vsel %vm502, %v941, %v943
  %v951 = vsel %vm502, %v947, %v941
  %v952 = vsel %vm524, %v951, 0.0
  %v953 = vsel %vm525, %v950, 0.0
  %v954 = vsel %vm526, %v949, 0.0
  %v955 = vsel %vm527, %v948, 0.0
  %956 = vrot.lane.b32.xlu0 %v888, 127
  %v957 = vpop.permute.xlu0 %956
  %958 = vrot.lane.b32.xlu0 %v889, 127
  %v959 = vpop.permute.xlu0 %958
  %960 = vrot.lane.b32.xlu0 %v890, 127
  %v961 = vpop.permute.xlu0 %960
  %962 = vrot.lane.b32.xlu0 %v891, 127
  %v963 = vpop.permute.xlu0 %962
  %v964 = vsel %vm540, %v961, %v963
  %v965 = vsel %vm540, %v959, %v961
  %v966 = vsel %vm540, %v957, %v959
  %v967 = vsel %vm540, %v963, %v957
  %v968 = vsel %vm562, %v966, 0.0
  %v969 = vsel %vm563, %v965, 0.0
  %v970 = vsel %vm564, %v964, 0.0
  %v971 = vsel %vm565, %v967, 0.0
  %972 = vrot.lane.b32.xlu0 %v888, 113
  %v973 = vpop.permute.xlu0 %972
  %974 = vrot.lane.b32.xlu0 %v889, 113
  %v975 = vpop.permute.xlu0 %974
  %976 = vrot.lane.b32.xlu0 %v890, 113
  %v977 = vpop.permute.xlu0 %976
  %978 = vrot.lane.b32.xlu0 %v891, 113
  %v979 = vpop.permute.xlu0 %978
  %v980 = vsel %vm578, %v977, %v979
  %v981 = vsel %vm578, %v975, %v977
  %v982 = vsel %vm578, %v973, %v975
  %v983 = vsel %vm578, %v979, %v973
  %v984 = vsel %vm600, %v982, 0.0
  %v985 = vsel %vm601, %v981, 0.0
  %v986 = vsel %vm602, %v980, 0.0
  %v987 = vsel %vm603, %v983, 0.0
  %988 = vrot.lane.b32.xlu0 %v888, 112
  %v989 = vpop.permute.xlu0 %988
  %990 = vrot.lane.b32.xlu0 %v889, 112
  %v991 = vpop.permute.xlu0 %990
  %992 = vrot.lane.b32.xlu0 %v890, 112
  %v993 = vpop.permute.xlu0 %992
  %994 = vrot.lane.b32.xlu0 %v891, 112
  %v995 = vpop.permute.xlu0 %994
  %v996 = vsel %vm616, %v993, %v995
  %v997 = vsel %vm616, %v991, %v993
  %v998 = vsel %vm616, %v989, %v991
  %v999 = vsel %vm616, %v995, %v989
  %v1000 = vsel %vm638, %v998, 0.0
  %v1001 = vsel %vm639, %v997, 0.0
  %v1002 = vsel %vm640, %v996, 0.0
  %v1003 = vsel %vm641, %v999, 0.0
  %1004 = vrot.lane.b32.xlu0 %v888, 111
  %v1005 = vpop.permute.xlu0 %1004
  %1006 = vrot.lane.b32.xlu0 %v889, 111
  %v1007 = vpop.permute.xlu0 %1006
  %1008 = vrot.lane.b32.xlu0 %v890, 111
  %v1009 = vpop.permute.xlu0 %1008
  %1010 = vrot.lane.b32.xlu0 %v891, 111
  %v1011 = vpop.permute.xlu0 %1010
  %v1012 = vsel %vm654, %v1009, %v1011
  %v1013 = vsel %vm654, %v1007, %v1009
  %v1014 = vsel %vm654, %v1005, %v1007
  %v1015 = vsel %vm654, %v1011, %v1005
  %v1016 = vsel %vm676, %v1014, 0.0
  %v1017 = vsel %vm677, %v1013, 0.0
  %v1018 = vsel %vm678, %v1012, 0.0
  %v1019 = vsel %vm679, %v1015, 0.0
  %v1020 = vld [vmem:[%s11] sm:$0xff]
  %v1021 = vld [vmem:[%s12] sm:$0xff]
  %1023 = vset.pattern.permute.xlu0 0
  %1024 = vperm.xlu0 %1023, %v1021
  %v1025 = vpop.permute.xlu0 %1024
  %v1028 = vsel %vm691, %v1020, 0
  %1030 = vmatprep.subr.mxu0 %v905
  %1031 = vmatpush1.msra.mxu0 %v904
  %1032 = vmatprep.subr.mxu0 %v921
  %1033 = vmatpush1.msra.mxu0 %v920
  %1034 = vmatprep.subr.mxu0 %v937
  %1035 = vmatpush1.msra.mxu0 %v936
  %1036 = vmatprep.subr.mxu0 %v953
  %1037 = vmatpush1.msra.mxu0 %v952
  %1038 = vmatprep.subr.mxu0 %v889
  %1039 = vmatpush1.msra.mxu0 %v888
  %1040 = vmatprep.subr.mxu0 %v969
  %1041 = vmatpush1.msra.mxu0 %v968
  %1042 = vmatprep.subr.mxu0 %v985
  %1043 = vmatpush1.msra.mxu0 %v984
  %1044 = vmatprep.subr.mxu0 %v1001
  %1045 = vmatpush1.msra.mxu0 %v1000
  %1046 = vmatprep.subr.mxu0 %v1017
  %1047 = vmatpush1.msra.mxu0 %v1016
  %1048 = vmatprep.subr.mxu0 0.0
  %1049 = vmatpush1.msra.mxu0 0.0
  %1050 = vmatprep.subr.mxu0 0.0
  %1051 = vmatpush1.msra.mxu0 0.0
  %1052 = vmatprep.subr.mxu0 0.0
  %1053 = vmatpush1.msra.mxu0 0.0
  %1054 = vmatprep.subr.mxu0 0.0
  %1055 = vmatpush1.msra.mxu0 0.0
  %1056 = vmatprep.subr.mxu0 0.0
  %1057 = vmatpush1.msra.mxu0 0.0
  %1058 = vmatprep.subr.mxu0 0.0
  %1059 = vmatpush1.msra.mxu0 0.0
  %1060 = vmatprep.subr.mxu0 0.0
  %1061 = vmatpush1.msra.mxu0 0.0
  %1062 = vmatprep.subr.mxu0 0.0
  %1063 = vmatpush1.msra.mxu0 0.0
  %1064 = vmatprep.subr.mxu0 0.0
  %1065 = vmatpush1.msra.mxu0 0.0
  %1066 = vmatprep.subr.mxu0 0.0
  %1067 = vmatpush1.msra.mxu0 0.0
  %1068 = vmatprep.subr.mxu0 0.0
  %1069 = vmatpush1.msra.mxu0 0.0
  %1070 = vmatprep.subr.mxu0 0.0
  %1071 = vmatpush1.msra.mxu0 0.0
  %1072 = vmatprep.subr.mxu0 0.0
  %1073 = vmatpush1.msra.mxu0 0.0
  %1074 = vmatprep.subr.mxu0 0.0
  %1075 = vmatpush1.msra.mxu0 0.0
  %1076 = vmatprep.subr.mxu0 0.0
  %1077 = vmatpush1.msra.mxu0 0.0
  %1078 = vmatprep.subr.mxu0 0.0
  %1079 = vmatpush1.msra.mxu0 0.0
  %1080 = vmatprep.subr.mxu0 0.0
  %1081 = vmatpush1.msra.mxu0 0.0
  %1082 = vmatprep.subr.mxu0 0.0
  %1083 = vmatpush1.msra.mxu0 0.0
  %1084 = vmatprep.subr.mxu0 0.0
  %1085 = vmatpush1.msra.mxu0 0.0
  %1086 = vmatprep.subr.mxu0 0.0
  %1087 = vmatpush1.msra.mxu0 0.0
  %1088 = vmatprep.subr.mxu0 0.0
  %1089 = vmatpush1.msra.mxu0 0.0
  %1090 = vmatprep.subr.mxu0 0.0
  %1091 = vmatpush1.msra.mxu0 0.0
  %1092 = vmatprep.subr.mxu0 0.0
  %1093 = vmatpush1.msra.mxu0 0.0
  %1094 = vmatprep.mubr.f32.mxu0 0.0
  %1095 = vmatmul.mubr.f32.gmra.mrb[0].mxu0 %v1028
  %v1096 = vpop.f32.mrb[0].mxu0
  %v1097 = vadd.f32 %v1025, %v1096
  %v1098 = vpop.f32.mrb[0].mxu0
  %v1099 = vadd.f32 %v1025, %v1098
  %1100 = vdwg.mxu0
  %1101 = vmatprep.subr.mxu0 %v907
  %1102 = vmatpush1.msra.mxu0 %v906
  %1103 = vmatprep.subr.mxu0 %v923
  %1104 = vmatpush1.msra.mxu0 %v922
  %1105 = vmatprep.subr.mxu0 %v939
  %1106 = vmatpush1.msra.mxu0 %v938
  %1107 = vmatprep.subr.mxu0 %v955
  %1108 = vmatpush1.msra.mxu0 %v954
  %1109 = vmatprep.subr.mxu0 %v891
  %1110 = vmatpush1.msra.mxu0 %v890
  %1111 = vmatprep.subr.mxu0 %v971
  %1112 = vmatpush1.msra.mxu0 %v970
  %1113 = vmatprep.subr.mxu0 %v987
  %1114 = vmatpush1.msra.mxu0 %v986
  %1115 = vmatprep.subr.mxu0 %v1003
  %1116 = vmatpush1.msra.mxu0 %v1002
  %1117 = vmatprep.subr.mxu0 %v1019
  %1118 = vmatpush1.msra.mxu0 %v1018
  %1119 = vmatprep.subr.mxu0 0.0
  %1120 = vmatpush1.msra.mxu0 0.0
  %1121 = vmatprep.subr.mxu0 0.0
  %1122 = vmatpush1.msra.mxu0 0.0
  %1123 = vmatprep.subr.mxu0 0.0
  %1124 = vmatpush1.msra.mxu0 0.0
  %1125 = vmatprep.subr.mxu0 0.0
  %1126 = vmatpush1.msra.mxu0 0.0
  %1127 = vmatprep.subr.mxu0 0.0
  %1128 = vmatpush1.msra.mxu0 0.0
  %1129 = vmatprep.subr.mxu0 0.0
  %1130 = vmatpush1.msra.mxu0 0.0
  %1131 = vmatprep.subr.mxu0 0.0
  %1132 = vmatpush1.msra.mxu0 0.0
  %1133 = vmatprep.subr.mxu0 0.0
  %1134 = vmatpush1.msra.mxu0 0.0
  %1135 = vmatprep.subr.mxu0 0.0
  %1136 = vmatpush1.msra.mxu0 0.0
  %1137 = vmatprep.subr.mxu0 0.0
  %1138 = vmatpush1.msra.mxu0 0.0
  %1139 = vmatprep.subr.mxu0 0.0
  %1140 = vmatpush1.msra.mxu0 0.0
  %1141 = vmatprep.subr.mxu0 0.0
  %1142 = vmatpush1.msra.mxu0 0.0
  %1143 = vmatprep.subr.mxu0 0.0
  %1144 = vmatpush1.msra.mxu0 0.0
  %1145 = vmatprep.subr.mxu0 0.0
  %1146 = vmatpush1.msra.mxu0 0.0
  %1147 = vmatprep.subr.mxu0 0.0
  %1148 = vmatpush1.msra.mxu0 0.0
  %1149 = vmatprep.subr.mxu0 0.0
  %1150 = vmatpush1.msra.mxu0 0.0
  %1151 = vmatprep.subr.mxu0 0.0
  %1152 = vmatpush1.msra.mxu0 0.0
  %1153 = vmatprep.subr.mxu0 0.0
  %1154 = vmatpush1.msra.mxu0 0.0
  %1155 = vmatprep.subr.mxu0 0.0
  %1156 = vmatpush1.msra.mxu0 0.0
  %1157 = vmatprep.subr.mxu0 0.0
  %1158 = vmatpush1.msra.mxu0 0.0
  %1159 = vmatprep.subr.mxu0 0.0
  %1160 = vmatpush1.msra.mxu0 0.0
  %1161 = vmatprep.subr.mxu0 0.0
  %1162 = vmatpush1.msra.mxu0 0.0
  %1163 = vmatprep.subr.mxu0 0.0
  %1164 = vmatpush1.msra.mxu0 0.0
  %1165 = vmatprep.mubr.f32.mxu0 0.0
  %1166 = vmatmul.mubr.f32.gmra.mrb[0].mxu0 %v1028
  %v1167 = vpop.f32.mrb[0].mxu0
  %v1168 = vadd.f32 %v1025, %v1167
  %v1169 = vpop.f32.mrb[0].mxu0
  %v1170 = vadd.f32 %v1025, %v1169
  %1171 = vdwg.mxu0
  %v1172 = vmax.f32 %v1097, 0.0
  %v1173 = vmax.f32 %v1099, 0.0
  %v1174 = vmax.f32 %v1168, 0.0
  %v1175 = vmax.f32 %v1170, 0.0
  %v1176 = vld [vmem:[%s13] sm:$0xff]
  %v1177 = vld [vmem:[%s14] sm:$0xff]
  %v1178 = vadd.f32 %v1172, %v1173
  %v1179 = vadd.f32 %v1178, %v1174
  %v1180 = vadd.f32 %v1179, %v1175
  %1181 = vadd.xlane.f32.xlu0 %v1180
  %v1182 = vpop.xlane.xlu0 %1181
  %v1183 = vmul.f32 %v1182, %v848
  %v1184 = vsub.f32 %v1172, %v1183
  %v1185 = vsub.f32 %v1173, %v1183
  %v1186 = vsub.f32 %v1174, %v1183
  %v1187 = vsub.f32 %v1175, %v1183
  %v1188 = vmul.f32 %v1184, %v1184
  %v1189 = vmul.f32 %v1185, %v1185
  %v1190 = vmul.f32 %v1186, %v1186
  %v1191 = vmul.f32 %v1187, %v1187
  %v1192 = vadd.f32 %v1188, %v1189
  %v1193 = vadd.f32 %v1192, %v1190
  %v1194 = vadd.f32 %v1193, %v1191
  %1195 = vadd.xlane.f32.xlu0 %v1194
  %v1196 = vpop.xlane.xlu0 %1195
  %v1197 = vmul.f32 %v1196, %v848
  %v1198 = vadd.f32 %v1197, 1e-05
  %v1199 = vrsqrt.pop %v1198
  %v1200 = vmul.f32 %v1184, %v1199
  %v1201 = vmul.f32 %v1185, %v1199
  %v1202 = vmul.f32 %v1186, %v1199
  %v1203 = vmul.f32 %v1187, %v1199
  %1205 = vset.pattern.permute.xlu0 0
  %1206 = vperm.xlu0 %1205, %v1176
  %v1207 = vpop.permute.xlu0 %1206
  %v1209 = vmul.f32 %v1200, %v1207
  %v1210 = vmul.f32 %v1201, %v1207
  %v1211 = vmul.f32 %v1202, %v1207
  %v1212 = vmul.f32 %v1203, %v1207
  %1214 = vset.pattern.permute.xlu0 0
  %1215 = vperm.xlu0 %1214, %v1177
  %v1216 = vpop.permute.xlu0 %1215
  %v1218 = vadd.f32 %v1209, %v1216
  %v1219 = vadd.f32 %v1210, %v1216
  %v1220 = vadd.f32 %v1211, %v1216
  %v1221 = vadd.f32 %v1212, %v1216
  %1222 = vrot.lane.b32.xlu0 %v1218, 17
  %v1223 = vpop.permute.xlu0 %1222
  %1224 = vrot.lane.b32.xlu0 %v1219, 17
  %v1225 = vpop.permute.xlu0 %1224
  %1226 = vrot.lane.b32.xlu0 %v1220, 17
  %v1227 = vpop.permute.xlu0 %1226
  %1228 = vrot.lane.b32.xlu0 %v1221, 17
  %v1229 = vpop.permute.xlu0 %1228
  %v1230 = vsel %vm388, %v1227, %v1229
  %v1231 = vsel %vm388, %v1225, %v1227
  %v1232 = vsel %vm388, %v1223, %v1225
  %v1233 = vsel %vm388, %v1229, %v1223
  %v1234 = vsel %vm410, %v1233, 0.0
  %v1235 = vsel %vm411, %v1232, 0.0
  %v1236 = vsel %vm412, %v1231, 0.0
  %v1237 = vsel %vm413, %v1230, 0.0
  %1238 = vrot.lane.b32.xlu0 %v1218, 16
  %v1239 = vpop.permute.xlu0 %1238
  %1240 = vrot.lane.b32.xlu0 %v1219, 16
  %v1241 = vpop.permute.xlu0 %1240
  %1242 = vrot.lane.b32.xlu0 %v1220, 16
  %v1243 = vpop.permute.xlu0 %1242
  %1244 = vrot.lane.b32.xlu0 %v1221, 16
  %v1245 = vpop.permute.xlu0 %1244
  %v1246 = vsel %vm426, %v1243, %v1245
  %v1247 = vsel %vm426, %v1241, %v1243
  %v1248 = vsel %vm426, %v1239, %v1241
  %v1249 = vsel %vm426, %v1245, %v1239
  %v1250 = vsel %vm448, %v1249, 0.0
  %v1251 = vsel %vm449, %v1248, 0.0
  %v1252 = vsel %vm450, %v1247, 0.0
  %v1253 = vsel %vm451, %v1246, 0.0
  %1254 = vrot.lane.b32.xlu0 %v1218, 15
  %v1255 = vpop.permute.xlu0 %1254
  %1256 = vrot.lane.b32.xlu0 %v1219, 15
  %v1257 = vpop.permute.xlu0 %1256
  %1258 = vrot.lane.b32.xlu0 %v1220, 15
  %v1259 = vpop.permute.xlu0 %1258
  %1260 = vrot.lane.b32.xlu0 %v1221, 15
  %v1261 = vpop.permute.xlu0 %1260
  %v1262 = vsel %vm464, %v1259, %v1261
  %v1263 = vsel %vm464, %v1257, %v1259
  %v1264 = vsel %vm464, %v1255, %v1257
  %v1265 = vsel %vm464, %v1261, %v1255
  %v1266 = vsel %vm486, %v1265, 0.0
  %v1267 = vsel %vm487, %v1264, 0.0
  %v1268 = vsel %vm488, %v1263, 0.0
  %v1269 = vsel %vm489, %v1262, 0.0
  %1270 = vrot.lane.b32.xlu0 %v1218, 14
  %v1271 = vpop.permute.xlu0 %1270
  %1272 = vrot.lane.b32.xlu0 %v1219, 14
  %v1273 = vpop.permute.xlu0 %1272
  %1274 = vrot.lane.b32.xlu0 %v1220, 14
  %v1275 = vpop.permute.xlu0 %1274
  %1276 = vrot.lane.b32.xlu0 %v1221, 14
  %v1277 = vpop.permute.xlu0 %1276
  %vm1278 = vcmp.lt.s32.totalorder %v387, 14
  %v1279 = vsel %vm1278, %v1275, %v1277
  %v1280 = vsel %vm1278, %v1273, %v1275
  %v1281 = vsel %vm1278, %v1271, %v1273
  %v1282 = vsel %vm1278, %v1277, %v1271
  %v1283 = vsel %vm80, 1, 0
  %v1284 = vlaneseq
  %v1285 = vshrl.u32 %v1284, 7
  %v1286 = vsub.s32 0, %v1285
  %v1287 = vrot.slane %v1283, %v1286
  %v1288 = vlaneseq
  %v1289 = vshrl.u32 %v1288, 7
  %v1290 = vsub.s32 1, %v1289
  %v1291 = vrot.slane %v1283, %v1290
  %v1292 = vlaneseq
  %v1293 = vshrl.u32 %v1292, 7
  %v1294 = vsub.s32 2, %v1293
  %v1295 = vrot.slane %v1283, %v1294
  %v1296 = vlaneseq
  %v1297 = vshrl.u32 %v1296, 7
  %v1298 = vsub.s32 3, %v1297
  %v1299 = vrot.slane %v1283, %v1298
  %vm1300 = vcmp.eq.s32.totalorder %v1287, 1
  %vm1301 = vcmp.eq.s32.totalorder %v1291, 1
  %vm1302 = vcmp.eq.s32.totalorder %v1295, 1
  %vm1303 = vcmp.eq.s32.totalorder %v1299, 1
  %v1304 = vsel %vm1300, %v1282, 0.0
  %v1305 = vsel %vm1301, %v1281, 0.0
  %v1306 = vsel %vm1302, %v1280, 0.0
  %v1307 = vsel %vm1303, %v1279, 0.0
  %1308 = vrot.lane.b32.xlu0 %v1218, 1
  %v1309 = vpop.permute.xlu0 %1308
  %1310 = vrot.lane.b32.xlu0 %v1219, 1
  %v1311 = vpop.permute.xlu0 %1310
  %1312 = vrot.lane.b32.xlu0 %v1220, 1
  %v1313 = vpop.permute.xlu0 %1312
  %1314 = vrot.lane.b32.xlu0 %v1221, 1
  %v1315 = vpop.permute.xlu0 %1314
  %v1316 = vsel %vm502, %v1313, %v1315
  %v1317 = vsel %vm502, %v1311, %v1313
  %v1318 = vsel %vm502, %v1309, %v1311
  %v1319 = vsel %vm502, %v1315, %v1309
  %v1320 = vsel %vm524, %v1319, 0.0
  %v1321 = vsel %vm525, %v1318, 0.0
  %v1322 = vsel %vm526, %v1317, 0.0
  %v1323 = vsel %vm527, %v1316, 0.0
  %1324 = vrot.lane.b32.xlu0 %v1218, 127
  %v1325 = vpop.permute.xlu0 %1324
  %1326 = vrot.lane.b32.xlu0 %v1219, 127
  %v1327 = vpop.permute.xlu0 %1326
  %1328 = vrot.lane.b32.xlu0 %v1220, 127
  %v1329 = vpop.permute.xlu0 %1328
  %1330 = vrot.lane.b32.xlu0 %v1221, 127
  %v1331 = vpop.permute.xlu0 %1330
  %v1332 = vsel %vm540, %v1329, %v1331
  %v1333 = vsel %vm540, %v1327, %v1329
  %v1334 = vsel %vm540, %v1325, %v1327
  %v1335 = vsel %vm540, %v1331, %v1325
  %v1336 = vsel %vm562, %v1334, 0.0
  %v1337 = vsel %vm563, %v1333, 0.0
  %v1338 = vsel %vm564, %v1332, 0.0
  %v1339 = vsel %vm565, %v1335, 0.0
  %1340 = vrot.lane.b32.xlu0 %v1218, 126
  %v1341 = vpop.permute.xlu0 %1340
  %1342 = vrot.lane.b32.xlu0 %v1219, 126
  %v1343 = vpop.permute.xlu0 %1342
  %1344 = vrot.lane.b32.xlu0 %v1220, 126
  %v1345 = vpop.permute.xlu0 %1344
  %1346 = vrot.lane.b32.xlu0 %v1221, 126
  %v1347 = vpop.permute.xlu0 %1346
  %vm1348 = vcmp.lt.s32.totalorder %v387, 126
  %v1349 = vsel %vm1348, %v1345, %v1347
  %v1350 = vsel %vm1348, %v1343, %v1345
  %v1351 = vsel %vm1348, %v1341, %v1343
  %v1352 = vsel %vm1348, %v1347, %v1341
  %v1353 = vsel %vm89, 1, 0
  %v1354 = vlaneseq
  %v1355 = vshrl.u32 %v1354, 7
  %v1356 = vsub.s32 0, %v1355
  %v1357 = vrot.slane %v1353, %v1356
  %v1358 = vlaneseq
  %v1359 = vshrl.u32 %v1358, 7
  %v1360 = vsub.s32 1, %v1359
  %v1361 = vrot.slane %v1353, %v1360
  %v1362 = vlaneseq
  %v1363 = vshrl.u32 %v1362, 7
  %v1364 = vsub.s32 2, %v1363
  %v1365 = vrot.slane %v1353, %v1364
  %v1366 = vlaneseq
  %v1367 = vshrl.u32 %v1366, 7
  %v1368 = vsub.s32 3, %v1367
  %v1369 = vrot.slane %v1353, %v1368
  %vm1370 = vcmp.eq.s32.totalorder %v1357, 1
  %vm1371 = vcmp.eq.s32.totalorder %v1361, 1
  %vm1372 = vcmp.eq.s32.totalorder %v1365, 1
  %vm1373 = vcmp.eq.s32.totalorder %v1369, 1
  %v1374 = vsel %vm1370, %v1351, 0.0
  %v1375 = vsel %vm1371, %v1350, 0.0
  %v1376 = vsel %vm1372, %v1349, 0.0
  %v1377 = vsel %vm1373, %v1352, 0.0
  %1378 = vrot.lane.b32.xlu0 %v1218, 113
  %v1379 = vpop.permute.xlu0 %1378
  %1380 = vrot.lane.b32.xlu0 %v1219, 113
  %v1381 = vpop.permute.xlu0 %1380
  %1382 = vrot.lane.b32.xlu0 %v1220, 113
  %v1383 = vpop.permute.xlu0 %1382
  %1384 = vrot.lane.b32.xlu0 %v1221, 113
  %v1385 = vpop.permute.xlu0 %1384
  %v1386 = vsel %vm578, %v1383, %v1385
  %v1387 = vsel %vm578, %v1381, %v1383
  %v1388 = vsel %vm578, %v1379, %v1381
  %v1389 = vsel %vm578, %v1385, %v1379
  %v1390 = vsel %vm600, %v1388, 0.0
  %v1391 = vsel %vm601, %v1387, 0.0
  %v1392 = vsel %vm602, %v1386, 0.0
  %v1393 = vsel %vm603, %v1389, 0.0
  %1394 = vrot.lane.b32.xlu0 %v1218, 112
  %v1395 = vpop.permute.xlu0 %1394
  %1396 = vrot.lane.b32.xlu0 %v1219, 112
  %v1397 = vpop.permute.xlu0 %1396
  %1398 = vrot.lane.b32.xlu0 %v1220, 112
  %v1399 = vpop.permute.xlu0 %1398
  %1400 = vrot.lane.b32.xlu0 %v1221, 112
  %v1401 = vpop.permute.xlu0 %1400
  %v1402 = vsel %vm616, %v1399, %v1401
  %v1403 = vsel %vm616, %v1397, %v1399
  %v1404 = vsel %vm616, %v1395, %v1397
  %v1405 = vsel %vm616, %v1401, %v1395
  %v1406 = vsel %vm638, %v1404, 0.0
  %v1407 = vsel %vm639, %v1403, 0.0
  %v1408 = vsel %vm640, %v1402, 0.0
  %v1409 = vsel %vm641, %v1405, 0.0
  %1410 = vrot.lane.b32.xlu0 %v1218, 111
  %v1411 = vpop.permute.xlu0 %1410
  %1412 = vrot.lane.b32.xlu0 %v1219, 111
  %v1413 = vpop.permute.xlu0 %1412
  %1414 = vrot.lane.b32.xlu0 %v1220, 111
  %v1415 = vpop.permute.xlu0 %1414
  %1416 = vrot.lane.b32.xlu0 %v1221, 111
  %v1417 = vpop.permute.xlu0 %1416
  %v1418 = vsel %vm654, %v1415, %v1417
  %v1419 = vsel %vm654, %v1413, %v1415
  %v1420 = vsel %vm654, %v1411, %v1413
  %v1421 = vsel %vm654, %v1417, %v1411
  %v1422 = vsel %vm676, %v1420, 0.0
  %v1423 = vsel %vm677, %v1419, 0.0
  %v1424 = vsel %vm678, %v1418, 0.0
  %v1425 = vsel %vm679, %v1421, 0.0
  %1426 = vrot.lane.b32.xlu0 %v1218, 110
  %v1427 = vpop.permute.xlu0 %1426
  %1428 = vrot.lane.b32.xlu0 %v1219, 110
  %v1429 = vpop.permute.xlu0 %1428
  %1430 = vrot.lane.b32.xlu0 %v1220, 110
  %v1431 = vpop.permute.xlu0 %1430
  %1432 = vrot.lane.b32.xlu0 %v1221, 110
  %v1433 = vpop.permute.xlu0 %1432
  %vm1434 = vcmp.lt.s32.totalorder %v387, 110
  %v1435 = vsel %vm1434, %v1431, %v1433
  %v1436 = vsel %vm1434, %v1429, %v1431
  %v1437 = vsel %vm1434, %v1427, %v1429
  %v1438 = vsel %vm1434, %v1433, %v1427
  %v1439 = vsel %vm101, 1, 0
  %v1440 = vlaneseq
  %v1441 = vshrl.u32 %v1440, 7
  %v1442 = vsub.s32 0, %v1441
  %v1443 = vrot.slane %v1439, %v1442
  %v1444 = vlaneseq
  %v1445 = vshrl.u32 %v1444, 7
  %v1446 = vsub.s32 1, %v1445
  %v1447 = vrot.slane %v1439, %v1446
  %v1448 = vlaneseq
  %v1449 = vshrl.u32 %v1448, 7
  %v1450 = vsub.s32 2, %v1449
  %v1451 = vrot.slane %v1439, %v1450
  %v1452 = vlaneseq
  %v1453 = vshrl.u32 %v1452, 7
  %v1454 = vsub.s32 3, %v1453
  %v1455 = vrot.slane %v1439, %v1454
  %vm1456 = vcmp.eq.s32.totalorder %v1443, 1
  %vm1457 = vcmp.eq.s32.totalorder %v1447, 1
  %vm1458 = vcmp.eq.s32.totalorder %v1451, 1
  %vm1459 = vcmp.eq.s32.totalorder %v1455, 1
  %v1460 = vsel %vm1456, %v1437, 0.0
  %v1461 = vsel %vm1457, %v1436, 0.0
  %v1462 = vsel %vm1458, %v1435, 0.0
  %v1463 = vsel %vm1459, %v1438, 0.0
  %1464 = vrot.lane.b32.xlu0 %v1218, 97
  %v1465 = vpop.permute.xlu0 %1464
  %1466 = vrot.lane.b32.xlu0 %v1219, 97
  %v1467 = vpop.permute.xlu0 %1466
  %1468 = vrot.lane.b32.xlu0 %v1220, 97
  %v1469 = vpop.permute.xlu0 %1468
  %1470 = vrot.lane.b32.xlu0 %v1221, 97
  %v1471 = vpop.permute.xlu0 %1470
  %vm1472 = vcmp.lt.s32.totalorder %v387, 97
  %v1473 = vsel %vm1472, %v1469, %v1471
  %v1474 = vsel %vm1472, %v1467, %v1469
  %v1475 = vsel %vm1472, %v1465, %v1467
  %v1476 = vsel %vm1472, %v1471, %v1465
  %v1477 = vsel %vm107, 1, 0
  %v1478 = vlaneseq
  %v1479 = vshrl.u32 %v1478, 7
  %v1480 = vsub.s32 0, %v1479
  %v1481 = vrot.slane %v1477, %v1480
  %v1482 = vlaneseq
  %v1483 = vshrl.u32 %v1482, 7
  %v1484 = vsub.s32 1, %v1483
  %v1485 = vrot.slane %v1477, %v1484
  %v1486 = vlaneseq
  %v1487 = vshrl.u32 %v1486, 7
  %v1488 = vsub.s32 2, %v1487
  %v1489 = vrot.slane %v1477, %v1488
  %v1490 = vlaneseq
  %v1491 = vshrl.u32 %v1490, 7
  %v1492 = vsub.s32 3, %v1491
  %v1493 = vrot.slane %v1477, %v1492
  %vm1494 = vcmp.eq.s32.totalorder %v1481, 1
  %vm1495 = vcmp.eq.s32.totalorder %v1485, 1
  %vm1496 = vcmp.eq.s32.totalorder %v1489, 1
  %vm1497 = vcmp.eq.s32.totalorder %v1493, 1
  %v1498 = vsel %vm1494, %v1475, 0.0
  %v1499 = vsel %vm1495, %v1474, 0.0
  %v1500 = vsel %vm1496, %v1473, 0.0
  %v1501 = vsel %vm1497, %v1476, 0.0
  %1502 = vrot.lane.b32.xlu0 %v1218, 96
  %v1503 = vpop.permute.xlu0 %1502
  %1504 = vrot.lane.b32.xlu0 %v1219, 96
  %v1505 = vpop.permute.xlu0 %1504
  %1506 = vrot.lane.b32.xlu0 %v1220, 96
  %v1507 = vpop.permute.xlu0 %1506
  %1508 = vrot.lane.b32.xlu0 %v1221, 96
  %v1509 = vpop.permute.xlu0 %1508
  %vm1510 = vcmp.lt.s32.totalorder %v387, 96
  %v1511 = vsel %vm1510, %v1507, %v1509
  %v1512 = vsel %vm1510, %v1505, %v1507
  %v1513 = vsel %vm1510, %v1503, %v1505
  %v1514 = vsel %vm1510, %v1509, %v1503
  %v1515 = vsel %vm109, 1, 0
  %v1516 = vlaneseq
  %v1517 = vshrl.u32 %v1516, 7
  %v1518 = vsub.s32 0, %v1517
  %v1519 = vrot.slane %v1515, %v1518
  %v1520 = vlaneseq
  %v1521 = vshrl.u32 %v1520, 7
  %v1522 = vsub.s32 1, %v1521
  %v1523 = vrot.slane %v1515, %v1522
  %v1524 = vlaneseq
  %v1525 = vshrl.u32 %v1524, 7
  %v1526 = vsub.s32 2, %v1525
  %v1527 = vrot.slane %v1515, %v1526
  %v1528 = vlaneseq
  %v1529 = vshrl.u32 %v1528, 7
  %v1530 = vsub.s32 3, %v1529
  %v1531 = vrot.slane %v1515, %v1530
  %vm1532 = vcmp.eq.s32.totalorder %v1519, 1
  %vm1533 = vcmp.eq.s32.totalorder %v1523, 1
  %vm1534 = vcmp.eq.s32.totalorder %v1527, 1
  %vm1535 = vcmp.eq.s32.totalorder %v1531, 1
  %v1536 = vsel %vm1532, %v1513, 0.0
  %v1537 = vsel %vm1533, %v1512, 0.0
  %v1538 = vsel %vm1534, %v1511, 0.0
  %v1539 = vsel %vm1535, %v1514, 0.0
  %1540 = vrot.lane.b32.xlu0 %v1218, 95
  %v1541 = vpop.permute.xlu0 %1540
  %1542 = vrot.lane.b32.xlu0 %v1219, 95
  %v1543 = vpop.permute.xlu0 %1542
  %1544 = vrot.lane.b32.xlu0 %v1220, 95
  %v1545 = vpop.permute.xlu0 %1544
  %1546 = vrot.lane.b32.xlu0 %v1221, 95
  %v1547 = vpop.permute.xlu0 %1546
  %vm1548 = vcmp.lt.s32.totalorder %v387, 95
  %v1549 = vsel %vm1548, %v1545, %v1547
  %v1550 = vsel %vm1548, %v1543, %v1545
  %v1551 = vsel %vm1548, %v1541, %v1543
  %v1552 = vsel %vm1548, %v1547, %v1541
  %v1553 = vsel %vm111, 1, 0
  %v1554 = vlaneseq
  %v1555 = vshrl.u32 %v1554, 7
  %v1556 = vsub.s32 0, %v1555
  %v1557 = vrot.slane %v1553, %v1556
  %v1558 = vlaneseq
  %v1559 = vshrl.u32 %v1558, 7
  %v1560 = vsub.s32 1, %v1559
  %v1561 = vrot.slane %v1553, %v1560
  %v1562 = vlaneseq
  %v1563 = vshrl.u32 %v1562, 7
  %v1564 = vsub.s32 2, %v1563
  %v1565 = vrot.slane %v1553, %v1564
  %v1566 = vlaneseq
  %v1567 = vshrl.u32 %v1566, 7
  %v1568 = vsub.s32 3, %v1567
  %v1569 = vrot.slane %v1553, %v1568
  %vm1570 = vcmp.eq.s32.totalorder %v1557, 1
  %vm1571 = vcmp.eq.s32.totalorder %v1561, 1
  %vm1572 = vcmp.eq.s32.totalorder %v1565, 1
  %vm1573 = vcmp.eq.s32.totalorder %v1569, 1
  %v1574 = vsel %vm1570, %v1551, 0.0
  %v1575 = vsel %vm1571, %v1550, 0.0
  %v1576 = vsel %vm1572, %v1549, 0.0
  %v1577 = vsel %vm1573, %v1552, 0.0
  %1578 = vrot.lane.b32.xlu0 %v1218, 94
  %v1579 = vpop.permute.xlu0 %1578
  %1580 = vrot.lane.b32.xlu0 %v1219, 94
  %v1581 = vpop.permute.xlu0 %1580
  %1582 = vrot.lane.b32.xlu0 %v1220, 94
  %v1583 = vpop.permute.xlu0 %1582
  %1584 = vrot.lane.b32.xlu0 %v1221, 94
  %v1585 = vpop.permute.xlu0 %1584
  %vm1586 = vcmp.lt.s32.totalorder %v387, 94
  %v1587 = vsel %vm1586, %v1583, %v1585
  %v1588 = vsel %vm1586, %v1581, %v1583
  %v1589 = vsel %vm1586, %v1579, %v1581
  %v1590 = vsel %vm1586, %v1585, %v1579
  %v1591 = vsel %vm113, 1, 0
  %v1592 = vlaneseq
  %v1593 = vshrl.u32 %v1592, 7
  %v1594 = vsub.s32 0, %v1593
  %v1595 = vrot.slane %v1591, %v1594
  %v1596 = vlaneseq
  %v1597 = vshrl.u32 %v1596, 7
  %v1598 = vsub.s32 1, %v1597
  %v1599 = vrot.slane %v1591, %v1598
  %v1600 = vlaneseq
  %v1601 = vshrl.u32 %v1600, 7
  %v1602 = vsub.s32 2, %v1601
  %v1603 = vrot.slane %v1591, %v1602
  %v1604 = vlaneseq
  %v1605 = vshrl.u32 %v1604, 7
  %v1606 = vsub.s32 3, %v1605
  %v1607 = vrot.slane %v1591, %v1606
  %vm1608 = vcmp.eq.s32.totalorder %v1595, 1
  %vm1609 = vcmp.eq.s32.totalorder %v1599, 1
  %vm1610 = vcmp.eq.s32.totalorder %v1603, 1
  %vm1611 = vcmp.eq.s32.totalorder %v1607, 1
  %v1612 = vsel %vm1608, %v1589, 0.0
  %v1613 = vsel %vm1609, %v1588, 0.0
  %v1614 = vsel %vm1610, %v1587, 0.0
  %v1615 = vsel %vm1611, %v1590, 0.0
  %v1616 = vld [vmem:[%s15] sm:$0xff]
  %v1617 = vld [vmem:[%s16] sm:$0xff]
  %1619 = vset.pattern.permute.xlu0 0
  %1620 = vperm.xlu0 %1619, %v1617
  %v1621 = vpop.permute.xlu0 %1620
  %1623 = vmatprep.subr.mxu0 %v1235
  %1624 = vmatpush1.msra.mxu0 %v1234
  %1625 = vmatprep.subr.mxu0 %v1251
  %1626 = vmatpush1.msra.mxu0 %v1250
  %1627 = vmatprep.subr.mxu0 %v1267
  %1628 = vmatpush1.msra.mxu0 %v1266
  %1629 = vmatprep.subr.mxu0 %v1305
  %1630 = vmatpush1.msra.mxu0 %v1304
  %1631 = vmatprep.subr.mxu0 %v1321
  %1632 = vmatpush1.msra.mxu0 %v1320
  %1633 = vmatprep.subr.mxu0 %v1219
  %1634 = vmatpush1.msra.mxu0 %v1218
  %1635 = vmatprep.subr.mxu0 %v1337
  %1636 = vmatpush1.msra.mxu0 %v1336
  %1637 = vmatprep.subr.mxu0 %v1375
  %1638 = vmatpush1.msra.mxu0 %v1374
  %1639 = vmatprep.subr.mxu0 %v1391
  %1640 = vmatpush1.msra.mxu0 %v1390
  %1641 = vmatprep.subr.mxu0 %v1407
  %1642 = vmatpush1.msra.mxu0 %v1406
  %1643 = vmatprep.subr.mxu0 %v1423
  %1644 = vmatpush1.msra.mxu0 %v1422
  %1645 = vmatprep.subr.mxu0 %v1461
  %1646 = vmatpush1.msra.mxu0 %v1460
  %1647 = vmatprep.subr.mxu0 %v1499
  %1648 = vmatpush1.msra.mxu0 %v1498
  %1649 = vmatprep.subr.mxu0 %v1537
  %1650 = vmatpush1.msra.mxu0 %v1536
  %1651 = vmatprep.subr.mxu0 %v1575
  %1652 = vmatpush1.msra.mxu0 %v1574
  %1653 = vmatprep.subr.mxu0 %v1613
  %1654 = vmatpush1.msra.mxu0 %v1612
  %1655 = vmatprep.subr.mxu0 0.0
  %1656 = vmatpush1.msra.mxu0 0.0
  %1657 = vmatprep.subr.mxu0 0.0
  %1658 = vmatpush1.msra.mxu0 0.0
  %1659 = vmatprep.subr.mxu0 0.0
  %1660 = vmatpush1.msra.mxu0 0.0
  %1661 = vmatprep.subr.mxu0 0.0
  %1662 = vmatpush1.msra.mxu0 0.0
  %1663 = vmatprep.subr.mxu0 0.0
  %1664 = vmatpush1.msra.mxu0 0.0
  %1665 = vmatprep.subr.mxu0 0.0
  %1666 = vmatpush1.msra.mxu0 0.0
  %1667 = vmatprep.subr.mxu0 0.0
  %1668 = vmatpush1.msra.mxu0 0.0
  %1669 = vmatprep.subr.mxu0 0.0
  %1670 = vmatpush1.msra.mxu0 0.0
  %1671 = vmatprep.subr.mxu0 0.0
  %1672 = vmatpush1.msra.mxu0 0.0
  %1673 = vmatprep.subr.mxu0 0.0
  %1674 = vmatpush1.msra.mxu0 0.0
  %1675 = vmatprep.subr.mxu0 0.0
  %1676 = vmatpush1.msra.mxu0 0.0
  %1677 = vmatprep.subr.mxu0 0.0
  %1678 = vmatpush1.msra.mxu0 0.0
  %1679 = vmatprep.subr.mxu0 0.0
  %1680 = vmatpush1.msra.mxu0 0.0
  %1681 = vmatprep.subr.mxu0 0.0
  %1682 = vmatpush1.msra.mxu0 0.0
  %1683 = vmatprep.subr.mxu0 0.0
  %1684 = vmatpush1.msra.mxu0 0.0
  %1685 = vmatprep.subr.mxu0 0.0
  %1686 = vmatpush1.msra.mxu0 0.0
  %1687 = vmatprep.mubr.f32.mxu0 0.0
  %1688 = vmatmul.mubr.f32.gmra.mrb[0].mxu0 %v1616
  %v1689 = vpop.f32.mrb[0].mxu0
  %v1690 = vadd.f32 %v1621, %v1689
  %v1691 = vpop.f32.mrb[0].mxu0
  %v1692 = vadd.f32 %v1621, %v1691
  %1693 = vdwg.mxu0
  %1694 = vmatprep.subr.mxu0 %v1237
  %1695 = vmatpush1.msra.mxu0 %v1236
  %1696 = vmatprep.subr.mxu0 %v1253
  %1697 = vmatpush1.msra.mxu0 %v1252
  %1698 = vmatprep.subr.mxu0 %v1269
  %1699 = vmatpush1.msra.mxu0 %v1268
  %1700 = vmatprep.subr.mxu0 %v1307
  %1701 = vmatpush1.msra.mxu0 %v1306
  %1702 = vmatprep.subr.mxu0 %v1323
  %1703 = vmatpush1.msra.mxu0 %v1322
  %1704 = vmatprep.subr.mxu0 %v1221
  %1705 = vmatpush1.msra.mxu0 %v1220
  %1706 = vmatprep.subr.mxu0 %v1339
  %1707 = vmatpush1.msra.mxu0 %v1338
  %1708 = vmatprep.subr.mxu0 %v1377
  %1709 = vmatpush1.msra.mxu0 %v1376
  %1710 = vmatprep.subr.mxu0 %v1393
  %1711 = vmatpush1.msra.mxu0 %v1392
  %1712 = vmatprep.subr.mxu0 %v1409
  %1713 = vmatpush1.msra.mxu0 %v1408
  %1714 = vmatprep.subr.mxu0 %v1425
  %1715 = vmatpush1.msra.mxu0 %v1424
  %1716 = vmatprep.subr.mxu0 %v1463
  %1717 = vmatpush1.msra.mxu0 %v1462
  %1718 = vmatprep.subr.mxu0 %v1501
  %1719 = vmatpush1.msra.mxu0 %v1500
  %1720 = vmatprep.subr.mxu0 %v1539
  %1721 = vmatpush1.msra.mxu0 %v1538
  %1722 = vmatprep.subr.mxu0 %v1577
  %1723 = vmatpush1.msra.mxu0 %v1576
  %1724 = vmatprep.subr.mxu0 %v1615
  %1725 = vmatpush1.msra.mxu0 %v1614
  %1726 = vmatprep.subr.mxu0 0.0
  %1727 = vmatpush1.msra.mxu0 0.0
  %1728 = vmatprep.subr.mxu0 0.0
  %1729 = vmatpush1.msra.mxu0 0.0
  %1730 = vmatprep.subr.mxu0 0.0
  %1731 = vmatpush1.msra.mxu0 0.0
  %1732 = vmatprep.subr.mxu0 0.0
  %1733 = vmatpush1.msra.mxu0 0.0
  %1734 = vmatprep.subr.mxu0 0.0
  %1735 = vmatpush1.msra.mxu0 0.0
  %1736 = vmatprep.subr.mxu0 0.0
  %1737 = vmatpush1.msra.mxu0 0.0
  %1738 = vmatprep.subr.mxu0 0.0
  %1739 = vmatpush1.msra.mxu0 0.0
  %1740 = vmatprep.subr.mxu0 0.0
  %1741 = vmatpush1.msra.mxu0 0.0
  %1742 = vmatprep.subr.mxu0 0.0
  %1743 = vmatpush1.msra.mxu0 0.0
  %1744 = vmatprep.subr.mxu0 0.0
  %1745 = vmatpush1.msra.mxu0 0.0
  %1746 = vmatprep.subr.mxu0 0.0
  %1747 = vmatpush1.msra.mxu0 0.0
  %1748 = vmatprep.subr.mxu0 0.0
  %1749 = vmatpush1.msra.mxu0 0.0
  %1750 = vmatprep.subr.mxu0 0.0
  %1751 = vmatpush1.msra.mxu0 0.0
  %1752 = vmatprep.subr.mxu0 0.0
  %1753 = vmatpush1.msra.mxu0 0.0
  %1754 = vmatprep.subr.mxu0 0.0
  %1755 = vmatpush1.msra.mxu0 0.0
  %1756 = vmatprep.subr.mxu0 0.0
  %1757 = vmatpush1.msra.mxu0 0.0
  %1758 = vmatprep.mubr.f32.mxu0 0.0
  %1759 = vmatmul.mubr.f32.gmra.mrb[0].mxu0 %v1616
  %v1760 = vpop.f32.mrb[0].mxu0
  %v1761 = vadd.f32 %v1621, %v1760
  %v1762 = vpop.f32.mrb[0].mxu0
  %v1763 = vadd.f32 %v1621, %v1762
  %1764 = vdwg.mxu0
  %1765 = vst [vmem:[%s17] sm:$0xff] %v1690
  %1766 = vst [vmem:[%s17 + $0x8] sm:$0xff] %v1692
  %1767 = vst [vmem:[%s17 + $0x10] sm:$0xff] %v1761
  %1768 = vst [vmem:[%s17 + $0x18] sm:$0xff] %v1763
  // Predicated region
  $region70: #{block_forward.1} parent=0 // pred_check
    _
  $region71: #{block_forward.1} parent=0 // pred_check_branch
    %1770 = sbr.rel (0) target = $region73
  $region72: #{block_forward.1} parent=0 // pred_region
    _
  $region73: #{block_forward.1} parent=0 // pred_fallthru
    _
  // Predicated region
  $region74: #{block_forward.1} parent=0 // pred_check
    _
  $region75: #{block_forward.1} parent=0 // pred_check_branch
    %1772 = sbr.rel (0) target = $region77
  $region76: #{block_forward.1} parent=0 // pred_region
    _
  $region77: #{block_forward.1} parent=0 // pred_fallthru
    _

</llo_original>
